<compile_context>
chip_gen: v7x
topology: tpu7x:2x2x1
jax: 0.10.0
libtpu: 0.0.40
codegen_flags: <defaults>
</compile_context>

<pallas_src>
import jax
import jax.numpy as jnp
from jax.experimental import pallas as pl
from jax.experimental.pallas import tpu as pltpu

EPS = 1e-5


# ----------------------------------------------------------------------------
# One-time parameter preparation (pure JAX, outside the kernel)
# ----------------------------------------------------------------------------
def _conv_row_matrix(w_hwio, w_in, w_out, pad):
    """Block-Toeplitz matrices turning a 3x3 conv into one MXU matmul per kh.

    Rows are flattened as (w_in, Cin) -> wi*Cin + ci, columns as
    (w_out, Cout) -> wo*Cout + co:
        M[kh, wi*Cin+ci, wo*Cout+co] = w[kh, kw, ci, co]  with wi = wo + kw - pad
    Taps with wi outside [0, w_in) are dropped, i.e. the horizontal zero padding
    is folded into the weights (no padded activation copies along W needed).
    """
    kH, kW, Cin, Cout = w_hwio.shape
    wi = jnp.arange(w_in)[:, None]
    wo = jnp.arange(w_out)[None, :]
    sel = jnp.stack([(wi == wo + kw - pad) for kw in range(kW)], axis=0)
    sel = sel.astype(w_hwio.dtype)                       # (kW, w_in, w_out)
    t = jnp.einsum("kpq,hkio->hpiqo", sel, w_hwio)       # (kH, w_in, Cin, w_out, Cout)
    return t.reshape(kH, w_in * Cin, w_out * Cout)


def _channel_broadcast_matrix(w_out, cout):
    """(Lo, Lo) 0/1 matrix: row-vec @ B sums all lanes with the same channel and
    broadcasts the per-channel total back to every lane of that channel."""
    ch = jnp.arange(w_out * cout) % cout
    return (ch[:, None] == ch[None, :]).astype(jnp.float32)


def prepare_params(params, H, W):
    """Hoisted weight prep: flip/transpose, Toeplitz matrices, lane-tiled vectors."""
    out_c = params["w1"].shape[1]
    Wo = W + 2
    f32 = jnp.float32
    # ConvTranspose2d(3x3, stride=1, pad=0) == valid conv of the pad-2 input with
    # the spatially flipped kernel, in/out channels swapped.
    w1_hwio = jnp.transpose(params["w1"][:, :, ::-1, ::-1], (2, 3, 0, 1)).astype(f32)
    # Conv2d weight (out_c, in_c, kh, kw) -> HWIO.
    w2_hwio = jnp.transpose(params["w2"], (2, 3, 1, 0)).astype(f32)
    flat = lambda v: jnp.tile(v.astype(f32), Wo).reshape(1, Wo * out_c)
    return {
        "w1_mat": _conv_row_matrix(w1_hwio, W, Wo, pad=2),    # (3, W*in_c,  Wo*out_c)
        "w2_mat": _conv_row_matrix(w2_hwio, Wo, Wo, pad=1),   # (3, Wo*out_c, Wo*out_c)
        "bsum": _channel_broadcast_matrix(Wo, out_c),         # (Wo*out_c, Wo*out_c)
        "b1": flat(params["b1"]), "g1": flat(params["g1"]), "beta1": flat(params["beta1"]),
        "b2": flat(params["b2"]), "g2": flat(params["g2"]), "beta2": flat(params["beta2"]),
    }


# ----------------------------------------------------------------------------
# Fused Pallas kernel
# ----------------------------------------------------------------------------
def _make_fused_kernel(N, H, W, Cin, Cout):
    Ho, Wo = H + 2, W + 2          # spatial size after the transpose conv
    Hp1 = H + 4                    # conv1 input: vertical pad 2
    Hp2 = Ho + 2                   # conv2 input: vertical pad 1
    Lo = Wo * Cout                 # lane-dense row width of activations/output
    inv_cnt = 1.0 / float(N * Ho * Wo)

    def kernel(x_ref, w1_ref, w2_ref,
               b1_ref, g1_ref, bb1_ref,
               b2_ref, g2_ref, bb2_ref,
               bsum_ref,
               o_ref, xv_ref, y1_ref):
        f32 = jnp.float32
        bsum = bsum_ref[...]

        def batch_norm_relu(blocks, g_f, bb_f):
            # Training-mode BatchNorm2d (batch mean, biased variance) + ReLU over
            # N blocks of shape (Ho, Wo*Cout).  Per-channel stats are formed by a
            # lane-group matmul against the 0/1 broadcast matrix (stays lane-dense).
            tot = jnp.zeros((1, Lo), f32)
            for a in blocks:
                tot = tot + jnp.sum(a, axis=0, keepdims=True)
            mean_f = jnp.dot(tot, bsum, preferred_element_type=f32) * inv_cnt
            centered = []
            sq = jnp.zeros((1, Lo), f32)
            for a in blocks:
                c = a - mean_f
                centered.append(c)
                sq = sq + jnp.sum(c * c, axis=0, keepdims=True)
            var_f = jnp.dot(sq, bsum, preferred_element_type=f32) * inv_cnt
            inv_f = jax.lax.rsqrt(var_f + EPS)
            return [jnp.maximum(c * inv_f * g_f + bb_f, 0.0) for c in centered]

        # ---- Stage A: stage the input with a 2-row vertical zero ring.
        #      (Horizontal padding is folded into the Toeplitz weight matrices.)
        xv_ref[...] = jnp.zeros_like(xv_ref)
        for n in range(N):
            xv_ref[n * Hp1 + 2: n * Hp1 + 2 + H, :] = x_ref[n * H: (n + 1) * H, :]

        # ---- Stage B: ConvTranspose2d(3x3) == 3 MXU matmuls per image.
        bias1 = jnp.zeros((Ho, Lo), f32) + b1_ref[...]
        a1 = []
        for n in range(N):
            acc = bias1
            for kh in range(3):
                acc = acc + jnp.dot(xv_ref[n * Hp1 + kh: n * Hp1 + kh + Ho, :],
                                    w1_ref[kh], preferred_element_type=f32)
            a1.append(acc)

        # ---- Stage C: BN1 + ReLU, written into the vertically padded conv2
        #      input (zero ring is kept intact -> it IS the conv2 padding).
        y1_ref[...] = jnp.zeros_like(y1_ref)
        for n, y in enumerate(batch_norm_relu(a1, g1_ref[...], bb1_ref[...])):
            y1_ref[n * Hp2 + 1: n * Hp2 + 1 + Ho, :] = y

        # ---- Stage D: Conv2d(3x3, pad=1) == 3 MXU matmuls per image.
        bias2 = jnp.zeros((Ho, Lo), f32) + b2_ref[...]
        a2 = []
        for n in range(N):
            acc = bias2
            for kh in range(3):
                acc = acc + jnp.dot(y1_ref[n * Hp2 + kh: n * Hp2 + kh + Ho, :],
                                    w2_ref[kh], preferred_element_type=f32)
            a2.append(acc)

        # ---- Stage E: BN2 + ReLU, lane-dense (Wo*Cout-wide) store to the output.
        for n, z in enumerate(batch_norm_relu(a2, g2_ref[...], bb2_ref[...])):
            o_ref[n * Ho: (n + 1) * Ho, :] = z

    return kernel


# ----------------------------------------------------------------------------
# Full block forward (NCHW in / NCHW out, matching PyTorch)
# ----------------------------------------------------------------------------
@jax.jit
def conv2d_transpose_block(x_nchw, prepped):
    N, Cin, H, W = x_nchw.shape
    Ho, Wo = H + 2, W + 2
    Cout = prepped["b1"].shape[1] // Wo

    # NCHW -> lane-dense 2D layout: rows = (n, h), lanes = (w, c).
    x2d = jnp.transpose(x_nchw, (0, 2, 3, 1)).astype(jnp.float32).reshape(N * H, W * Cin)

    kernel = _make_fused_kernel(N, H, W, Cin, Cout)
    out2d = pl.pallas_call(
        kernel,
        out_shape=jax.ShapeDtypeStruct((N * Ho, Wo * Cout), jnp.float32),
        scratch_shapes=[
            pltpu.VMEM((N * (H + 4), W * Cin), jnp.float32),      # vertically padded input
            pltpu.VMEM((N * (Ho + 2), Wo * Cout), jnp.float32),   # padded BN1/ReLU output
        ],
    )(x2d, prepped["w1_mat"], prepped["w2_mat"],
      prepped["b1"], prepped["g1"], prepped["beta1"],
      prepped["b2"], prepped["g2"], prepped["beta2"],
      prepped["bsum"])

    out = out2d.reshape(N, Ho, Wo, Cout)
    return jnp.transpose(out, (0, 3, 1, 2))                       # back to NCHW


# ----------------------------------------------------------------------------
# Pure-JAX reference (for the correctness check)
# ----------------------------------------------------------------------------
def _bn_relu_ref(y, g, b):
    mean = y.mean(axis=(0, 2, 3), keepdims=True)
    var = ((y - mean) ** 2).mean(axis=(0, 2, 3), keepdims=True)
    out = (y - mean) * jax.lax.rsqrt(var + EPS)
    out = out * g[None, :, None, None] + b[None, :, None, None]
    return jnp.maximum(out, 0.0)


def reference_forward(x, params):
    dn = ("NCHW", "OIHW", "NCHW")
    hp = jax.lax.Precision.HIGHEST
    wt = jnp.transpose(params["w1"][:, :, ::-1, ::-1], (1, 0, 2, 3))    # OIHW
    y = jax.lax.conv_general_dilated(x, wt, (1, 1), ((2, 2), (2, 2)),
                                     dimension_numbers=dn, precision=hp)
    y = y + params["b1"][None, :, None, None]
    y = _bn_relu_ref(y, params["g1"], params["beta1"])
    y = jax.lax.conv_general_dilated(y, params["w2"], (1, 1), ((1, 1), (1, 1)),
                                     dimension_numbers=dn, precision=hp)
    y = y + params["b2"][None, :, None, None]
    y = _bn_relu_ref(y, params["g2"], params["beta2"])
    return y


# ----------------------------------------------------------------------------
if __name__ == "__main__":
    in_c, out_c = 4, 8
    N, H, W = 2, 16, 16

    key = jax.random.PRNGKey(0)
    k1, k2, k3, k4, k5, k6, kx = jax.random.split(key, 7)
    params = {
        "w1": jax.random.normal(k1, (in_c, out_c, 3, 3), jnp.float32) * 0.1,
        "b1": jax.random.normal(k2, (out_c,), jnp.float32) * 0.1,
        "g1": 1.0 + 0.1 * jax.random.normal(k5, (out_c,), jnp.float32),
        "beta1": 0.1 * jax.random.normal(k6, (out_c,), jnp.float32),
        "w2": jax.random.normal(k3, (out_c, out_c, 3, 3), jnp.float32) * 0.1,
        "b2": jax.random.normal(k4, (out_c,), jnp.float32) * 0.1,
        "g2": jnp.ones((out_c,), jnp.float32),
        "beta2": jnp.zeros((out_c,), jnp.float32),
    }

    x = jax.random.normal(kx, (N, in_c, H, W), jnp.float32)

    prepped = prepare_params(params, H, W)          # one-time weight prep
    out = jax.block_until_ready(conv2d_transpose_block(x, prepped))
    assert out.shape == (N, out_c, H + 2, W + 2), out.shape

    ref = jax.block_until_ready(reference_forward(x, params))
    # Tolerance leaves headroom for MXU f32 matmul rounding vs the HIGHEST-precision
    # XLA reference.
    err = float(jnp.max(jnp.abs(out - ref)))
    assert jnp.allclose(out, ref, atol=5e-3, rtol=5e-3), err

    print("KERNEL_OK")
</pallas_src>

<mosaic_0001>
module attributes {stable_mosaic.version = 11 : i64} {
  func.func @kernel(%arg0: memref<32x64xf32, #tpu.memory_space<vmem>>, %arg1: memref<3x64x144xf32, #tpu.memory_space<vmem>>, %arg2: memref<3x144x144xf32, #tpu.memory_space<vmem>>, %arg3: memref<1x144xf32, #tpu.memory_space<vmem>>, %arg4: memref<1x144xf32, #tpu.memory_space<vmem>>, %arg5: memref<1x144xf32, #tpu.memory_space<vmem>>, %arg6: memref<1x144xf32, #tpu.memory_space<vmem>>, %arg7: memref<1x144xf32, #tpu.memory_space<vmem>>, %arg8: memref<1x144xf32, #tpu.memory_space<vmem>>, %arg9: memref<144x144xf32, #tpu.memory_space<vmem>>, %arg10: memref<36x144xf32, #tpu.memory_space<vmem>>, %arg11: memref<40x64xf32, #tpu.memory_space<vmem>>, %arg12: memref<40x144xf32, #tpu.memory_space<vmem>>) attributes {dimension_semantics = [], scalar_prefetch = 0 : i64, scratch_operands = 2 : i64, tpu.core_type = #tpu.core_type<tc>} {
    %c0 = arith.constant 0 : index
    %c0_0 = arith.constant 0 : index
    %0 = vector.load %arg9[%c0, %c0_0] : memref<144x144xf32, #tpu.memory_space<vmem>>, vector<144x144xf32>
    %cst = arith.constant 0.000000e+00 : f32
    %1 = vector.broadcast %cst : f32 to vector<40x64xf32>
    %c0_1 = arith.constant 0 : index
    %c0_2 = arith.constant 0 : index
    %2 = vector.load %arg11[%c0_1, %c0_2] : memref<40x64xf32, #tpu.memory_space<vmem>>, vector<40x64xf32>
    tpu.vector_store %arg11[%c0_1, %c0_2], %1 {strides = array<i32>} : memref<40x64xf32, #tpu.memory_space<vmem>>, vector<40x64xf32>,
    %c0_3 = arith.constant 0 : index
    %c0_4 = arith.constant 0 : index
    %3 = vector.load %arg0[%c0_3, %c0_4] : memref<32x64xf32, #tpu.memory_space<vmem>>, vector<16x64xf32>
    %c2 = arith.constant 2 : index
    %c0_5 = arith.constant 0 : index
    %4 = vector.load %arg11[%c2, %c0_5] : memref<40x64xf32, #tpu.memory_space<vmem>>, vector<16x64xf32>
    tpu.vector_store %arg11[%c2, %c0_5], %3 {strides = array<i32>} : memref<40x64xf32, #tpu.memory_space<vmem>>, vector<16x64xf32>,
    %c16 = arith.constant 16 : index
    %c0_6 = arith.constant 0 : index
    %5 = vector.load %arg0[%c16, %c0_6] : memref<32x64xf32, #tpu.memory_space<vmem>>, vector<16x64xf32>
    %c22 = arith.constant 22 : index
    %c0_7 = arith.constant 0 : index
    %6 = vector.load %arg11[%c22, %c0_7] : memref<40x64xf32, #tpu.memory_space<vmem>>, vector<16x64xf32>
    tpu.vector_store %arg11[%c22, %c0_7], %5 {strides = array<i32>} : memref<40x64xf32, #tpu.memory_space<vmem>>, vector<16x64xf32>,
    %cst_8 = arith.constant 0.000000e+00 : f32
    %7 = vector.broadcast %cst_8 : f32 to vector<18x144xf32>
    %c0_9 = arith.constant 0 : index
    %c0_10 = arith.constant 0 : index
    %8 = vector.load %arg3[%c0_9, %c0_10] : memref<1x144xf32, #tpu.memory_space<vmem>>, vector<1x144xf32>
    %9 = vector.broadcast %8 : vector<1x144xf32> to vector<18x144xf32>
    %10 = arith.addf %7, %9 : vector<18x144xf32>
    %c0_11 = arith.constant 0 : index
    %c0_12 = arith.constant 0 : index
    %11 = vector.load %arg11[%c0_11, %c0_12] : memref<40x64xf32, #tpu.memory_space<vmem>>, vector<18x64xf32>
    %c0_13 = arith.constant 0 : index
    %c0_14 = arith.constant 0 : index
    %c0_15 = arith.constant 0 : index
    %12 = vector.load %arg1[%c0_13, %c0_14, %c0_15] : memref<3x64x144xf32, #tpu.memory_space<vmem>>, vector<1x64x144xf32>
    %13 = vector.shape_cast %12 : vector<1x64x144xf32> to vector<64x144xf32>
    %cst_16 = arith.constant dense<0.000000e+00> : vector<18x144xf32>
    %14 = tpu.matmul %11, %13, %cst_16 {dimension_numbers = #tpu.dot_dimension_numbers<[1], [0], [0], [1], [0, 0, 1, 1], [], []>} : vector<18x64xf32>, vector<64x144xf32>, vector<18x144xf32> -> vector<18x144xf32>
    %15 = arith.addf %10, %14 : vector<18x144xf32>
    %c1 = arith.constant 1 : index
    %c0_17 = arith.constant 0 : index
    %16 = vector.load %arg11[%c1, %c0_17] : memref<40x64xf32, #tpu.memory_space<vmem>>, vector<18x64xf32>
    %c1_18 = arith.constant 1 : index
    %c0_19 = arith.constant 0 : index
    %c0_20 = arith.constant 0 : index
    %17 = vector.load %arg1[%c1_18, %c0_19, %c0_20] : memref<3x64x144xf32, #tpu.memory_space<vmem>>, vector<1x64x144xf32>
    %18 = vector.shape_cast %17 : vector<1x64x144xf32> to vector<64x144xf32>
    %cst_21 = arith.constant dense<0.000000e+00> : vector<18x144xf32>
    %19 = tpu.matmul %16, %18, %cst_21 {dimension_numbers = #tpu.dot_dimension_numbers<[1], [0], [0], [1], [0, 0, 1, 1], [], []>} : vector<18x64xf32>, vector<64x144xf32>, vector<18x144xf32> -> vector<18x144xf32>
    %20 = arith.addf %15, %19 : vector<18x144xf32>
    %c2_22 = arith.constant 2 : index
    %c0_23 = arith.constant 0 : index
    %21 = vector.load %arg11[%c2_22, %c0_23] : memref<40x64xf32, #tpu.memory_space<vmem>>, vector<18x64xf32>
    %c2_24 = arith.constant 2 : index
    %c0_25 = arith.constant 0 : index
    %c0_26 = arith.constant 0 : index
    %22 = vector.load %arg1[%c2_24, %c0_25, %c0_26] : memref<3x64x144xf32, #tpu.memory_space<vmem>>, vector<1x64x144xf32>
    %23 = vector.shape_cast %22 : vector<1x64x144xf32> to vector<64x144xf32>
    %cst_27 = arith.constant dense<0.000000e+00> : vector<18x144xf32>
    %24 = tpu.matmul %21, %23, %cst_27 {dimension_numbers = #tpu.dot_dimension_numbers<[1], [0], [0], [1], [0, 0, 1, 1], [], []>} : vector<18x64xf32>, vector<64x144xf32>, vector<18x144xf32> -> vector<18x144xf32>
    %25 = arith.addf %20, %24 : vector<18x144xf32>
    %c20 = arith.constant 20 : index
    %c0_28 = arith.constant 0 : index
    %26 = vector.load %arg11[%c20, %c0_28] : memref<40x64xf32, #tpu.memory_space<vmem>>, vector<18x64xf32>
    %c0_29 = arith.constant 0 : index
    %c0_30 = arith.constant 0 : index
    %c0_31 = arith.constant 0 : index
    %27 = vector.load %arg1[%c0_29, %c0_30, %c0_31] : memref<3x64x144xf32, #tpu.memory_space<vmem>>, vector<1x64x144xf32>
    %28 = vector.shape_cast %27 : vector<1x64x144xf32> to vector<64x144xf32>
    %cst_32 = arith.constant dense<0.000000e+00> : vector<18x144xf32>
    %29 = tpu.matmul %26, %28, %cst_32 {dimension_numbers = #tpu.dot_dimension_numbers<[1], [0], [0], [1], [0, 0, 1, 1], [], []>} : vector<18x64xf32>, vector<64x144xf32>, vector<18x144xf32> -> vector<18x144xf32>
    %30 = arith.addf %10, %29 : vector<18x144xf32>
    %c21 = arith.constant 21 : index
    %c0_33 = arith.constant 0 : index
    %31 = vector.load %arg11[%c21, %c0_33] : memref<40x64xf32, #tpu.memory_space<vmem>>, vector<18x64xf32>
    %c1_34 = arith.constant 1 : index
    %c0_35 = arith.constant 0 : index
    %c0_36 = arith.constant 0 : index
    %32 = vector.load %arg1[%c1_34, %c0_35, %c0_36] : memref<3x64x144xf32, #tpu.memory_space<vmem>>, vector<1x64x144xf32>
    %33 = vector.shape_cast %32 : vector<1x64x144xf32> to vector<64x144xf32>
    %cst_37 = arith.constant dense<0.000000e+00> : vector<18x144xf32>
    %34 = tpu.matmul %31, %33, %cst_37 {dimension_numbers = #tpu.dot_dimension_numbers<[1], [0], [0], [1], [0, 0, 1, 1], [], []>} : vector<18x64xf32>, vector<64x144xf32>, vector<18x144xf32> -> vector<18x144xf32>
    %35 = arith.addf %30, %34 : vector<18x144xf32>
    %c22_38 = arith.constant 22 : index
    %c0_39 = arith.constant 0 : index
    %36 = vector.load %arg11[%c22_38, %c0_39] : memref<40x64xf32, #tpu.memory_space<vmem>>, vector<18x64xf32>
    %c2_40 = arith.constant 2 : index
    %c0_41 = arith.constant 0 : index
    %c0_42 = arith.constant 0 : index
    %37 = vector.load %arg1[%c2_40, %c0_41, %c0_42] : memref<3x64x144xf32, #tpu.memory_space<vmem>>, vector<1x64x144xf32>
    %38 = vector.shape_cast %37 : vector<1x64x144xf32> to vector<64x144xf32>
    %cst_43 = arith.constant dense<0.000000e+00> : vector<18x144xf32>
    %39 = tpu.matmul %36, %38, %cst_43 {dimension_numbers = #tpu.dot_dimension_numbers<[1], [0], [0], [1], [0, 0, 1, 1], [], []>} : vector<18x64xf32>, vector<64x144xf32>, vector<18x144xf32> -> vector<18x144xf32>
    %40 = arith.addf %35, %39 : vector<18x144xf32>
    %cst_44 = arith.constant 0.000000e+00 : f32
    %41 = vector.broadcast %cst_44 : f32 to vector<40x144xf32>
    %c0_45 = arith.constant 0 : index
    %c0_46 = arith.constant 0 : index
    %42 = vector.load %arg12[%c0_45, %c0_46] : memref<40x144xf32, #tpu.memory_space<vmem>>, vector<40x144xf32>
    tpu.vector_store %arg12[%c0_45, %c0_46], %41 {strides = array<i32>} : memref<40x144xf32, #tpu.memory_space<vmem>>, vector<40x144xf32>,
    %c0_47 = arith.constant 0 : index
    %c0_48 = arith.constant 0 : index
    %43 = vector.load %arg4[%c0_47, %c0_48] : memref<1x144xf32, #tpu.memory_space<vmem>>, vector<1x144xf32>
    %c0_49 = arith.constant 0 : index
    %c0_50 = arith.constant 0 : index
    %44 = vector.load %arg5[%c0_49, %c0_50] : memref<1x144xf32, #tpu.memory_space<vmem>>, vector<1x144xf32>
    %cst_51 = arith.constant 0.000000e+00 : f32
    %45 = vector.broadcast %cst_51 : f32 to vector<1x144xf32>
    %cst_52 = arith.constant dense<0.000000e+00> : vector<144xf32>
    %46 = vector.multi_reduction <add>, %25, %cst_52 [0] : vector<18x144xf32> to vector<144xf32>
    %47 = vector.shape_cast %46 : vector<144xf32> to vector<1x144xf32>
    %48 = arith.addf %45, %47 : vector<1x144xf32>
    %cst_53 = arith.constant dense<0.000000e+00> : vector<144xf32>
    %49 = vector.multi_reduction <add>, %40, %cst_53 [0] : vector<18x144xf32> to vector<144xf32>
    %50 = vector.shape_cast %49 : vector<144xf32> to vector<1x144xf32>
    %51 = arith.addf %48, %50 : vector<1x144xf32>
    %cst_54 = arith.constant dense<0.000000e+00> : vector<1x144xf32>
    %52 = tpu.matmul %51, %0, %cst_54 {dimension_numbers = #tpu.dot_dimension_numbers<[1], [0], [0], [1], [0, 0, 1, 1], [], []>} : vector<1x144xf32>, vector<144x144xf32>, vector<1x144xf32> -> vector<1x144xf32>
    %cst_55 = arith.constant 0.00154320989 : f32
    %53 = vector.broadcast %cst_55 : f32 to vector<1x144xf32>
    %54 = arith.mulf %52, %53 : vector<1x144xf32>
    %cst_56 = arith.constant 0.000000e+00 : f32
    %55 = vector.broadcast %cst_56 : f32 to vector<1x144xf32>
    %56 = vector.broadcast %54 : vector<1x144xf32> to vector<18x144xf32>
    %57 = arith.subf %25, %56 : vector<18x144xf32>
    %58 = arith.mulf %57, %57 : vector<18x144xf32>
    %cst_57 = arith.constant dense<0.000000e+00> : vector<144xf32>
    %59 = vector.multi_reduction <add>, %58, %cst_57 [0] : vector<18x144xf32> to vector<144xf32>
    %60 = vector.shape_cast %59 : vector<144xf32> to vector<1x144xf32>
    %61 = arith.addf %55, %60 : vector<1x144xf32>
    %62 = vector.broadcast %54 : vector<1x144xf32> to vector<18x144xf32>
    %63 = arith.subf %40, %62 : vector<18x144xf32>
    %64 = arith.mulf %63, %63 : vector<18x144xf32>
    %cst_58 = arith.constant dense<0.000000e+00> : vector<144xf32>
    %65 = vector.multi_reduction <add>, %64, %cst_58 [0] : vector<18x144xf32> to vector<144xf32>
    %66 = vector.shape_cast %65 : vector<144xf32> to vector<1x144xf32>
    %67 = arith.addf %61, %66 : vector<1x144xf32>
    %cst_59 = arith.constant dense<0.000000e+00> : vector<1x144xf32>
    %68 = tpu.matmul %67, %0, %cst_59 {dimension_numbers = #tpu.dot_dimension_numbers<[1], [0], [0], [1], [0, 0, 1, 1], [], []>} : vector<1x144xf32>, vector<144x144xf32>, vector<1x144xf32> -> vector<1x144xf32>
    %cst_60 = arith.constant 0.00154320989 : f32
    %69 = vector.broadcast %cst_60 : f32 to vector<1x144xf32>
    %70 = arith.mulf %68, %69 : vector<1x144xf32>
    %cst_61 = arith.constant 9.99999974E-6 : f32
    %71 = vector.broadcast %cst_61 : f32 to vector<1x144xf32>
    %72 = arith.addf %70, %71 : vector<1x144xf32>
    %73 = math.rsqrt %72 : vector<1x144xf32>
    %74 = vector.broadcast %73 : vector<1x144xf32> to vector<18x144xf32>
    %75 = arith.mulf %57, %74 : vector<18x144xf32>
    %76 = vector.broadcast %43 : vector<1x144xf32> to vector<18x144xf32>
    %77 = arith.mulf %75, %76 : vector<18x144xf32>
    %78 = vector.broadcast %44 : vector<1x144xf32> to vector<18x144xf32>
    %79 = arith.addf %77, %78 : vector<18x144xf32>
    %cst_62 = arith.constant 0.000000e+00 : f32
    %80 = vector.broadcast %cst_62 : f32 to vector<18x144xf32>
    %81 = arith.maximumf %79, %80 : vector<18x144xf32>
    %82 = vector.broadcast %73 : vector<1x144xf32> to vector<18x144xf32>
    %83 = arith.mulf %63, %82 : vector<18x144xf32>
    %84 = vector.broadcast %43 : vector<1x144xf32> to vector<18x144xf32>
    %85 = arith.mulf %83, %84 : vector<18x144xf32>
    %86 = vector.broadcast %44 : vector<1x144xf32> to vector<18x144xf32>
    %87 = arith.addf %85, %86 : vector<18x144xf32>
    %cst_63 = arith.constant 0.000000e+00 : f32
    %88 = vector.broadcast %cst_63 : f32 to vector<18x144xf32>
    %89 = arith.maximumf %87, %88 : vector<18x144xf32>
    %c1_64 = arith.constant 1 : index
    %c0_65 = arith.constant 0 : index
    %90 = vector.load %arg12[%c1_64, %c0_65] : memref<40x144xf32, #tpu.memory_space<vmem>>, vector<18x144xf32>
    tpu.vector_store %arg12[%c1_64, %c0_65], %81 {strides = array<i32>} : memref<40x144xf32, #tpu.memory_space<vmem>>, vector<18x144xf32>,
    %c21_66 = arith.constant 21 : index
    %c0_67 = arith.constant 0 : index
    %91 = vector.load %arg12[%c21_66, %c0_67] : memref<40x144xf32, #tpu.memory_space<vmem>>, vector<18x144xf32>
    tpu.vector_store %arg12[%c21_66, %c0_67], %89 {strides = array<i32>} : memref<40x144xf32, #tpu.memory_space<vmem>>, vector<18x144xf32>,
    %cst_68 = arith.constant 0.000000e+00 : f32
    %92 = vector.broadcast %cst_68 : f32 to vector<18x144xf32>
    %c0_69 = arith.constant 0 : index
    %c0_70 = arith.constant 0 : index
    %93 = vector.load %arg6[%c0_69, %c0_70] : memref<1x144xf32, #tpu.memory_space<vmem>>, vector<1x144xf32>
    %94 = vector.broadcast %93 : vector<1x144xf32> to vector<18x144xf32>
    %95 = arith.addf %92, %94 : vector<18x144xf32>
    %c0_71 = arith.constant 0 : index
    %c0_72 = arith.constant 0 : index
    %96 = vector.load %arg12[%c0_71, %c0_72] : memref<40x144xf32, #tpu.memory_space<vmem>>, vector<18x144xf32>
    %c0_73 = arith.constant 0 : index
    %c0_74 = arith.constant 0 : index
    %c0_75 = arith.constant 0 : index
    %97 = vector.load %arg2[%c0_73, %c0_74, %c0_75] : memref<3x144x144xf32, #tpu.memory_space<vmem>>, vector<1x144x144xf32>
    %98 = vector.shape_cast %97 : vector<1x144x144xf32> to vector<144x144xf32>
    %cst_76 = arith.constant dense<0.000000e+00> : vector<18x144xf32>
    %99 = tpu.matmul %96, %98, %cst_76 {dimension_numbers = #tpu.dot_dimension_numbers<[1], [0], [0], [1], [0, 0, 1, 1], [], []>} : vector<18x144xf32>, vector<144x144xf32>, vector<18x144xf32> -> vector<18x144xf32>
    %100 = arith.addf %95, %99 : vector<18x144xf32>
    %c1_77 = arith.constant 1 : index
    %c0_78 = arith.constant 0 : index
    %101 = vector.load %arg12[%c1_77, %c0_78] : memref<40x144xf32, #tpu.memory_space<vmem>>, vector<18x144xf32>
    %c1_79 = arith.constant 1 : index
    %c0_80 = arith.constant 0 : index
    %c0_81 = arith.constant 0 : index
    %102 = vector.load %arg2[%c1_79, %c0_80, %c0_81] : memref<3x144x144xf32, #tpu.memory_space<vmem>>, vector<1x144x144xf32>
    %103 = vector.shape_cast %102 : vector<1x144x144xf32> to vector<144x144xf32>
    %cst_82 = arith.constant dense<0.000000e+00> : vector<18x144xf32>
    %104 = tpu.matmul %101, %103, %cst_82 {dimension_numbers = #tpu.dot_dimension_numbers<[1], [0], [0], [1], [0, 0, 1, 1], [], []>} : vector<18x144xf32>, vector<144x144xf32>, vector<18x144xf32> -> vector<18x144xf32>
    %105 = arith.addf %100, %104 : vector<18x144xf32>
    %c2_83 = arith.constant 2 : index
    %c0_84 = arith.constant 0 : index
    %106 = vector.load %arg12[%c2_83, %c0_84] : memref<40x144xf32, #tpu.memory_space<vmem>>, vector<18x144xf32>
    %c2_85 = arith.constant 2 : index
    %c0_86 = arith.constant 0 : index
    %c0_87 = arith.constant 0 : index
    %107 = vector.load %arg2[%c2_85, %c0_86, %c0_87] : memref<3x144x144xf32, #tpu.memory_space<vmem>>, vector<1x144x144xf32>
    %108 = vector.shape_cast %107 : vector<1x144x144xf32> to vector<144x144xf32>
    %cst_88 = arith.constant dense<0.000000e+00> : vector<18x144xf32>
    %109 = tpu.matmul %106, %108, %cst_88 {dimension_numbers = #tpu.dot_dimension_numbers<[1], [0], [0], [1], [0, 0, 1, 1], [], []>} : vector<18x144xf32>, vector<144x144xf32>, vector<18x144xf32> -> vector<18x144xf32>
    %110 = arith.addf %105, %109 : vector<18x144xf32>
    %c20_89 = arith.constant 20 : index
    %c0_90 = arith.constant 0 : index
    %111 = vector.load %arg12[%c20_89, %c0_90] : memref<40x144xf32, #tpu.memory_space<vmem>>, vector<18x144xf32>
    %c0_91 = arith.constant 0 : index
    %c0_92 = arith.constant 0 : index
    %c0_93 = arith.constant 0 : index
    %112 = vector.load %arg2[%c0_91, %c0_92, %c0_93] : memref<3x144x144xf32, #tpu.memory_space<vmem>>, vector<1x144x144xf32>
    %113 = vector.shape_cast %112 : vector<1x144x144xf32> to vector<144x144xf32>
    %cst_94 = arith.constant dense<0.000000e+00> : vector<18x144xf32>
    %114 = tpu.matmul %111, %113, %cst_94 {dimension_numbers = #tpu.dot_dimension_numbers<[1], [0], [0], [1], [0, 0, 1, 1], [], []>} : vector<18x144xf32>, vector<144x144xf32>, vector<18x144xf32> -> vector<18x144xf32>
    %115 = arith.addf %95, %114 : vector<18x144xf32>
    %c21_95 = arith.constant 21 : index
    %c0_96 = arith.constant 0 : index
    %116 = vector.load %arg12[%c21_95, %c0_96] : memref<40x144xf32, #tpu.memory_space<vmem>>, vector<18x144xf32>
    %c1_97 = arith.constant 1 : index
    %c0_98 = arith.constant 0 : index
    %c0_99 = arith.constant 0 : index
    %117 = vector.load %arg2[%c1_97, %c0_98, %c0_99] : memref<3x144x144xf32, #tpu.memory_space<vmem>>, vector<1x144x144xf32>
    %118 = vector.shape_cast %117 : vector<1x144x144xf32> to vector<144x144xf32>
    %cst_100 = arith.constant dense<0.000000e+00> : vector<18x144xf32>
    %119 = tpu.matmul %116, %118, %cst_100 {dimension_numbers = #tpu.dot_dimension_numbers<[1], [0], [0], [1], [0, 0, 1, 1], [], []>} : vector<18x144xf32>, vector<144x144xf32>, vector<18x144xf32> -> vector<18x144xf32>
    %120 = arith.addf %115, %119 : vector<18x144xf32>
    %c22_101 = arith.constant 22 : index
    %c0_102 = arith.constant 0 : index
    %121 = vector.load %arg12[%c22_101, %c0_102] : memref<40x144xf32, #tpu.memory_space<vmem>>, vector<18x144xf32>
    %c2_103 = arith.constant 2 : index
    %c0_104 = arith.constant 0 : index
    %c0_105 = arith.constant 0 : index
    %122 = vector.load %arg2[%c2_103, %c0_104, %c0_105] : memref<3x144x144xf32, #tpu.memory_space<vmem>>, vector<1x144x144xf32>
    %123 = vector.shape_cast %122 : vector<1x144x144xf32> to vector<144x144xf32>
    %cst_106 = arith.constant dense<0.000000e+00> : vector<18x144xf32>
    %124 = tpu.matmul %121, %123, %cst_106 {dimension_numbers = #tpu.dot_dimension_numbers<[1], [0], [0], [1], [0, 0, 1, 1], [], []>} : vector<18x144xf32>, vector<144x144xf32>, vector<18x144xf32> -> vector<18x144xf32>
    %125 = arith.addf %120, %124 : vector<18x144xf32>
    %c0_107 = arith.constant 0 : index
    %c0_108 = arith.constant 0 : index
    %126 = vector.load %arg7[%c0_107, %c0_108] : memref<1x144xf32, #tpu.memory_space<vmem>>, vector<1x144xf32>
    %c0_109 = arith.constant 0 : index
    %c0_110 = arith.constant 0 : index
    %127 = vector.load %arg8[%c0_109, %c0_110] : memref<1x144xf32, #tpu.memory_space<vmem>>, vector<1x144xf32>
    %cst_111 = arith.constant 0.000000e+00 : f32
    %128 = vector.broadcast %cst_111 : f32 to vector<1x144xf32>
    %cst_112 = arith.constant dense<0.000000e+00> : vector<144xf32>
    %129 = vector.multi_reduction <add>, %110, %cst_112 [0] : vector<18x144xf32> to vector<144xf32>
    %130 = vector.shape_cast %129 : vector<144xf32> to vector<1x144xf32>
    %131 = arith.addf %128, %130 : vector<1x144xf32>
    %cst_113 = arith.constant dense<0.000000e+00> : vector<144xf32>
    %132 = vector.multi_reduction <add>, %125, %cst_113 [0] : vector<18x144xf32> to vector<144xf32>
    %133 = vector.shape_cast %132 : vector<144xf32> to vector<1x144xf32>
    %134 = arith.addf %131, %133 : vector<1x144xf32>
    %cst_114 = arith.constant dense<0.000000e+00> : vector<1x144xf32>
    %135 = tpu.matmul %134, %0, %cst_114 {dimension_numbers = #tpu.dot_dimension_numbers<[1], [0], [0], [1], [0, 0, 1, 1], [], []>} : vector<1x144xf32>, vector<144x144xf32>, vector<1x144xf32> -> vector<1x144xf32>
    %cst_115 = arith.constant 0.00154320989 : f32
    %136 = vector.broadcast %cst_115 : f32 to vector<1x144xf32>
    %137 = arith.mulf %135, %136 : vector<1x144xf32>
    %cst_116 = arith.constant 0.000000e+00 : f32
    %138 = vector.broadcast %cst_116 : f32 to vector<1x144xf32>
    %139 = vector.broadcast %137 : vector<1x144xf32> to vector<18x144xf32>
    %140 = arith.subf %110, %139 : vector<18x144xf32>
    %141 = arith.mulf %140, %140 : vector<18x144xf32>
    %cst_117 = arith.constant dense<0.000000e+00> : vector<144xf32>
    %142 = vector.multi_reduction <add>, %141, %cst_117 [0] : vector<18x144xf32> to vector<144xf32>
    %143 = vector.shape_cast %142 : vector<144xf32> to vector<1x144xf32>
    %144 = arith.addf %138, %143 : vector<1x144xf32>
    %145 = vector.broadcast %137 : vector<1x144xf32> to vector<18x144xf32>
    %146 = arith.subf %125, %145 : vector<18x144xf32>
    %147 = arith.mulf %146, %146 : vector<18x144xf32>
    %cst_118 = arith.constant dense<0.000000e+00> : vector<144xf32>
    %148 = vector.multi_reduction <add>, %147, %cst_118 [0] : vector<18x144xf32> to vector<144xf32>
    %149 = vector.shape_cast %148 : vector<144xf32> to vector<1x144xf32>
    %150 = arith.addf %144, %149 : vector<1x144xf32>
    %cst_119 = arith.constant dense<0.000000e+00> : vector<1x144xf32>
    %151 = tpu.matmul %150, %0, %cst_119 {dimension_numbers = #tpu.dot_dimension_numbers<[1], [0], [0], [1], [0, 0, 1, 1], [], []>} : vector<1x144xf32>, vector<144x144xf32>, vector<1x144xf32> -> vector<1x144xf32>
    %cst_120 = arith.constant 0.00154320989 : f32
    %152 = vector.broadcast %cst_120 : f32 to vector<1x144xf32>
    %153 = arith.mulf %151, %152 : vector<1x144xf32>
    %cst_121 = arith.constant 9.99999974E-6 : f32
    %154 = vector.broadcast %cst_121 : f32 to vector<1x144xf32>
    %155 = arith.addf %153, %154 : vector<1x144xf32>
    %156 = math.rsqrt %155 : vector<1x144xf32>
    %157 = vector.broadcast %156 : vector<1x144xf32> to vector<18x144xf32>
    %158 = arith.mulf %140, %157 : vector<18x144xf32>
    %159 = vector.broadcast %126 : vector<1x144xf32> to vector<18x144xf32>
    %160 = arith.mulf %158, %159 : vector<18x144xf32>
    %161 = vector.broadcast %127 : vector<1x144xf32> to vector<18x144xf32>
    %162 = arith.addf %160, %161 : vector<18x144xf32>
    %cst_122 = arith.constant 0.000000e+00 : f32
    %163 = vector.broadcast %cst_122 : f32 to vector<18x144xf32>
    %164 = arith.maximumf %162, %163 : vector<18x144xf32>
    %165 = vector.broadcast %156 : vector<1x144xf32> to vector<18x144xf32>
    %166 = arith.mulf %146, %165 : vector<18x144xf32>
    %167 = vector.broadcast %126 : vector<1x144xf32> to vector<18x144xf32>
    %168 = arith.mulf %166, %167 : vector<18x144xf32>
    %169 = vector.broadcast %127 : vector<1x144xf32> to vector<18x144xf32>
    %170 = arith.addf %168, %169 : vector<18x144xf32>
    %cst_123 = arith.constant 0.000000e+00 : f32
    %171 = vector.broadcast %cst_123 : f32 to vector<18x144xf32>
    %172 = arith.maximumf %170, %171 : vector<18x144xf32>
    %c0_124 = arith.constant 0 : index
    %c0_125 = arith.constant 0 : index
    %173 = vector.load %arg10[%c0_124, %c0_125] : memref<36x144xf32, #tpu.memory_space<vmem>>, vector<18x144xf32>
    tpu.vector_store %arg10[%c0_124, %c0_125], %164 {strides = array<i32>} : memref<36x144xf32, #tpu.memory_space<vmem>>, vector<18x144xf32>,
    %c18 = arith.constant 18 : index
    %c0_126 = arith.constant 0 : index
    %174 = vector.load %arg10[%c18, %c0_126] : memref<36x144xf32, #tpu.memory_space<vmem>>, vector<18x144xf32>
    tpu.vector_store %arg10[%c18, %c0_126], %172 {strides = array<i32>} : memref<36x144xf32, #tpu.memory_space<vmem>>, vector<18x144xf32>,
    return
  }
}

</mosaic_0001>

<llo_original>
// kernel: conv2d_transpose_block.1
$region0: #{conv2d_transpose_block.1}
  #allocation0 [shape = 'u32[]', space=smem, size = 0x4, offset = 0x4, fixed_abs, tag = 'smem constant byte address 0x4 - core index']
  #allocation1 [shape = 'u32[144,128]{1,0:T(1,128)}', space=vmem, size = 0x12000, scoped, tag = 'internal scratch']
  #allocation2 [shape = 'f32[40,64]{1,0:T(8,128)}', space=vmem, size = 0x5000, scoped, tag = 'scratch operand']
  #allocation3 [shape = 'f32[40,144]{1,0:T(8,128)}', space=vmem, size = 0xa000, scoped, tag = 'scratch operand']
  %s0 = inlined_call_operand.vmem [shape: f32[32,64], index: 0, kind: input, shape index: {}]
  %s1 = inlined_call_operand.vmem [shape: f32[3,64,144], index: 1, kind: input, shape index: {}]
  %s2 = inlined_call_operand.hbm [shape: f32[3,144,144], index: 2, kind: input, shape index: {}]
  %s3 = inlined_call_operand.vmem [shape: f32[1,144], index: 3, kind: input, shape index: {}]
  %s4 = inlined_call_operand.vmem [shape: f32[1,144], index: 4, kind: input, shape index: {}]
  %s5 = inlined_call_operand.vmem [shape: f32[1,144], index: 5, kind: input, shape index: {}]
  %s6 = inlined_call_operand.vmem [shape: f32[1,144], index: 6, kind: input, shape index: {}]
  %s7 = inlined_call_operand.vmem [shape: f32[1,144], index: 7, kind: input, shape index: {}]
  %s8 = inlined_call_operand.vmem [shape: f32[1,144], index: 8, kind: input, shape index: {}]
  %s9 = inlined_call_operand.hbm [shape: f32[144,144], index: 9, kind: input, shape index: {}]
  %s10 = inlined_call_operand.vmem [shape: f32[36,144], index: 10, kind: output, shape index: {}]
  %s11 = sld [smem:[#allocation0]]
  $region58: #{conv2d_transpose_block.1} parent=0
    _
  %s13 = ssub.s32 1, %s11
  %s14 = scalar_select 0, %s13, %s11
  $region1: #{conv2d_transpose_block.1} parent=0
    #allocation4 [shape = 'u8[442368]{0}', space=vmem, size = 0x6c000, scoped, tag = 'input window, operand 2, single buffered']
    #allocation5 [shape = 's32[1]{0}', space=sflag, size = 0x4, scoped, tag = 'scoped memory for conv2d_transpose_block.1']
    #allocation6 [shape = 'u8[147456]{0}', space=vmem, size = 0x24000, scoped, tag = 'input window, operand 9, single buffered']
    #allocation7 [shape = 's32[1]{0}', space=sflag, size = 0x4, scoped, tag = 'scoped memory for conv2d_transpose_block.1']
    %15 = vsyncpa [#allocation5], 0
    %16 = vsyncpa [#allocation7], 0
    // Predicated region
    $region2: #{conv2d_transpose_block.1} parent=1 // pred_check
      _
    $region3: #{conv2d_transpose_block.1} parent=1 // pred_check_branch
      %18 = sbr.rel (0) target = $region5
    $region4: #{conv2d_transpose_block.1} parent=1 // pred_region
      _
    $region5: #{conv2d_transpose_block.1} parent=1 // pred_fallthru
      _
    // Predicated region
    $region6: #{conv2d_transpose_block.1} parent=1 // pred_check
      _
    $region7: #{conv2d_transpose_block.1} parent=1 // pred_check_branch
      %20 = sbr.rel (0) target = $region9
    $region8: #{conv2d_transpose_block.1} parent=1 // pred_region
      _
    $region9: #{conv2d_transpose_block.1} parent=1 // pred_fallthru
      _
    // Predicated region
    $region10: #{conv2d_transpose_block.1} parent=1 // pred_check
      _
    $region11: #{conv2d_transpose_block.1} parent=1 // pred_check_branch
      %22 = sbr.rel (0) target = $region13
    $region12: #{conv2d_transpose_block.1} parent=1 // pred_region
      %s24 = ssub.s32 13824, 13824
      %25 = vsyncadd [#allocation5], %s24
      %s26 = sshll.u32 [#allocation4], 4
      %s27 = int_to_ptr.vmem [resolvable:$true] %s26
      %32 = dma.hbm_to_vmem [thread:$0]  %s2, 13824, %s27, [#allocation5], 256, 256, 16
    $region13: #{conv2d_transpose_block.1} parent=1 // pred_fallthru
      _
    // Predicated region
    $region14: #{conv2d_transpose_block.1} parent=1 // pred_check
      _
    $region15: #{conv2d_transpose_block.1} parent=1 // pred_check_branch
      %34 = sbr.rel (0) target = $region17
    $region16: #{conv2d_transpose_block.1} parent=1 // pred_region
      _
    $region17: #{conv2d_transpose_block.1} parent=1 // pred_fallthru
      _
    // Predicated region
    $region18: #{conv2d_transpose_block.1} parent=1 // pred_check
      _
    $region19: #{conv2d_transpose_block.1} parent=1 // pred_check_branch
      %36 = sbr.rel (0) target = $region21
    $region20: #{conv2d_transpose_block.1} parent=1 // pred_region
      _
    $region21: #{conv2d_transpose_block.1} parent=1 // pred_fallthru
      _
    // Predicated region
    $region22: #{conv2d_transpose_block.1} parent=1 // pred_check
      _
    $region23: #{conv2d_transpose_block.1} parent=1 // pred_check_branch
      %38 = sbr.rel (0) target = $region25
    $region24: #{conv2d_transpose_block.1} parent=1 // pred_region
      _
    $region25: #{conv2d_transpose_block.1} parent=1 // pred_fallthru
      _
    // Predicated region
    $region26: #{conv2d_transpose_block.1} parent=1 // pred_check
      _
    $region27: #{conv2d_transpose_block.1} parent=1 // pred_check_branch
      %40 = sbr.rel (0) target = $region29
    $region28: #{conv2d_transpose_block.1} parent=1 // pred_region
      _
    $region29: #{conv2d_transpose_block.1} parent=1 // pred_fallthru
      _
    // Predicated region
    $region30: #{conv2d_transpose_block.1} parent=1 // pred_check
      _
    $region31: #{conv2d_transpose_block.1} parent=1 // pred_check_branch
      %42 = sbr.rel (0) target = $region33
    $region32: #{conv2d_transpose_block.1} parent=1 // pred_region
      _
    $region33: #{conv2d_transpose_block.1} parent=1 // pred_fallthru
      _
    // Predicated region
    $region34: #{conv2d_transpose_block.1} parent=1 // pred_check
      _
    $region35: #{conv2d_transpose_block.1} parent=1 // pred_check_branch
      %44 = sbr.rel (0) target = $region37
    $region36: #{conv2d_transpose_block.1} parent=1 // pred_region
      _
    $region37: #{conv2d_transpose_block.1} parent=1 // pred_fallthru
      _
    // Predicated region
    $region38: #{conv2d_transpose_block.1} parent=1 // pred_check
      _
    $region39: #{conv2d_transpose_block.1} parent=1 // pred_check_branch
      %46 = sbr.rel (0) target = $region41
    $region40: #{conv2d_transpose_block.1} parent=1 // pred_region
      %s48 = ssub.s32 4608, 4608
      %49 = vsyncadd [#allocation7], %s48
      %s50 = sshll.u32 [#allocation6], 4
      %s51 = int_to_ptr.vmem [resolvable:$true] %s50
      %56 = dma.hbm_to_vmem [thread:$0]  %s9, 4608, %s51, [#allocation7], 256, 256, 16
    $region41: #{conv2d_transpose_block.1} parent=1 // pred_fallthru
      _
    // Predicated region
    $region42: #{conv2d_transpose_block.1} parent=1 // pred_check
      _
    $region43: #{conv2d_transpose_block.1} parent=1 // pred_check_branch
      %58 = sbr.rel (0) target = $region45
    $region44: #{conv2d_transpose_block.1} parent=1 // pred_region
      %59 = dma.done [#allocation5], 13824
    $region45: #{conv2d_transpose_block.1} parent=1 // pred_fallthru
      _
    // Predicated region
    $region46: #{conv2d_transpose_block.1} parent=1 // pred_check
      _
    $region47: #{conv2d_transpose_block.1} parent=1 // pred_check_branch
      %61 = sbr.rel (0) target = $region49
    $region48: #{conv2d_transpose_block.1} parent=1 // pred_region
      %62 = dma.done [#allocation7], 4608
    $region49: #{conv2d_transpose_block.1} parent=1 // pred_fallthru
      _
    %v63 = vld [vmem:[#allocation6] sm:$0xff]
    %v64 = vld [vmem:[#allocation6 + $0x8] sm:$0xff]
    %v65 = vld [vmem:[#allocation6 + $0x10] sm:$0xff]
    %v66 = vld [vmem:[#allocation6 + $0x18] sm:$0xff]
    %v67 = vld [vmem:[#allocation6 + $0x20] sm:$0xff]
    %v68 = vld [vmem:[#allocation6 + $0x28] sm:$0xff]
    %v69 = vld [vmem:[#allocation6 + $0x30] sm:$0xff]
    %v70 = vld [vmem:[#allocation6 + $0x38] sm:$0xff]
    %v71 = vld [vmem:[#allocation6 + $0x40] sm:$0xff]
    %v72 = vld [vmem:[#allocation6 + $0x48] sm:$0xff]
    %v73 = vld [vmem:[#allocation6 + $0x50] sm:$0xff]
    %v74 = vld [vmem:[#allocation6 + $0x58] sm:$0xff]
    %v75 = vld [vmem:[#allocation6 + $0x60] sm:$0xff]
    %v76 = vld [vmem:[#allocation6 + $0x68] sm:$0xff]
    %v77 = vld [vmem:[#allocation6 + $0x70] sm:$0xff]
    %v78 = vld [vmem:[#allocation6 + $0x78] sm:$0xff]
    %v79 = vld [vmem:[#allocation6 + $0x80] sm:$0xff]
    %v80 = vld [vmem:[#allocation6 + $0x88] sm:$0xff]
    %v81 = vld [vmem:[#allocation6 + $0x90] sm:$0xff]
    %v82 = vld [vmem:[#allocation6 + $0x98] sm:$0xff]
    %v83 = vld [vmem:[#allocation6 + $0xa0] sm:$0xff]
    %v84 = vld [vmem:[#allocation6 + $0xa8] sm:$0xff]
    %v85 = vld [vmem:[#allocation6 + $0xb0] sm:$0xff]
    %v86 = vld [vmem:[#allocation6 + $0xb8] sm:$0xff]
    %v87 = vld [vmem:[#allocation6 + $0xc0] sm:$0xff]
    %v88 = vld [vmem:[#allocation6 + $0xc8] sm:$0xff]
    %v89 = vld [vmem:[#allocation6 + $0xd0] sm:$0xff]
    %v90 = vld [vmem:[#allocation6 + $0xd8] sm:$0xff]
    %v91 = vld [vmem:[#allocation6 + $0xe0] sm:$0xff]
    %v92 = vld [vmem:[#allocation6 + $0xe8] sm:$0xff]
    %v93 = vld [vmem:[#allocation6 + $0xf0] sm:$0xff]
    %v94 = vld [vmem:[#allocation6 + $0xf8] sm:$0xff]
    %v95 = vld [vmem:[#allocation6 + $0x100] sm:$0xff]
    %v96 = vld [vmem:[#allocation6 + $0x108] sm:$0xff]
    %v97 = vld [vmem:[#allocation6 + $0x110] sm:$0xff]
    %v98 = vld [vmem:[#allocation6 + $0x118] sm:$0xff]
    %vm99 = vcmask 523264
    %100 = vst.msk [vmem:[#allocation2] sm:$0xff] %vm99, 0.0
    %101 = vst.msk [vmem:[#allocation2 + $0x8] sm:$0xff] %vm99, 0.0
    %102 = vst.msk [vmem:[#allocation2 + $0x10] sm:$0xff] %vm99, 0.0
    %103 = vst.msk [vmem:[#allocation2 + $0x18] sm:$0xff] %vm99, 0.0
    %104 = vst.msk [vmem:[#allocation2 + $0x20] sm:$0xff] %vm99, 0.0
    %v105 = vld [vmem:[%s0] sm:$0xff]
    %v106 = vld [vmem:[%s0 + $0x8] sm:$0xff]
    %107 = vst.msk [vmem:[#allocation2 + $0x2] sm:$0xff] %vm99, %v105
    %108 = vst.msk [vmem:[#allocation2 + $0xa] sm:$0xff] %vm99, %v106
    %v109 = vld [vmem:[%s0 + $0x10] sm:$0xff]
    %v110 = vld [vmem:[%s0 + $0x18] sm:$0xff]
    %111 = vst.msk [vmem:[#allocation2 + $0x16] sm:$0xff] %vm99, %v109
    %112 = vst.msk [vmem:[#allocation2 + $0x1e] sm:$0xff] %vm99, %v110
    %v113 = vld [vmem:[%s3] sm:$0x3]
    %v115 = vlaneseq
    %v116 = vshrl.u32 %v115, 7
    %v117 = vsub.s32 0, %v116
    %v118 = vrot.slane %v113, %v117
    %v119 = vlaneseq
    %v120 = vshrl.u32 %v119, 7
    %v121 = vsub.s32 1, %v120
    %v122 = vrot.slane %v113, %v121
    %v125 = vadd.f32 %v118, 0.0
    %v126 = vadd.f32 %v122, 0.0
    %v127 = vld [vmem:[#allocation2] sm:$0xff]
    %v128 = vld [vmem:[#allocation2 + $0x8] sm:$0xff]
    %v129 = vld [vmem:[#allocation2 + $0x10] sm:$0x3]
    %v130 = vld [vmem:[%s1] sm:$0xff]
    %v131 = vld [vmem:[%s1 + $0x8] sm:$0xff]
    %v132 = vld [vmem:[%s1 + $0x10] sm:$0xff]
    %v133 = vld [vmem:[%s1 + $0x18] sm:$0xff]
    %v134 = vld [vmem:[%s1 + $0x20] sm:$0xff]
    %v135 = vld [vmem:[%s1 + $0x28] sm:$0xff]
    %v136 = vld [vmem:[%s1 + $0x30] sm:$0xff]
    %v137 = vld [vmem:[%s1 + $0x38] sm:$0xff]
    %v138 = vld [vmem:[%s1 + $0x40] sm:$0xff]
    %v139 = vld [vmem:[%s1 + $0x48] sm:$0xff]
    %v140 = vld [vmem:[%s1 + $0x50] sm:$0xff]
    %v141 = vld [vmem:[%s1 + $0x58] sm:$0xff]
    %v142 = vld [vmem:[%s1 + $0x60] sm:$0xff]
    %v143 = vld [vmem:[%s1 + $0x68] sm:$0xff]
    %v144 = vld [vmem:[%s1 + $0x70] sm:$0xff]
    %v145 = vld [vmem:[%s1 + $0x78] sm:$0xff]
    %v147 = vsel %vm99, %v127, 0
    %v150 = vsel %vm99, %v128, 0
    %v153 = vsel %vm99, %v129, 0
    %155 = vmatprep.subr.mxu0 %v131
    %156 = vmatpush1.msra.mxu0 %v130
    %157 = vmatprep.subr.mxu0 %v133
    %158 = vmatpush1.msra.mxu0 %v132
    %159 = vmatprep.subr.mxu0 %v135
    %160 = vmatpush1.msra.mxu0 %v134
    %161 = vmatprep.subr.mxu0 %v137
    %162 = vmatpush1.msra.mxu0 %v136
    %163 = vmatprep.subr.mxu0 %v139
    %164 = vmatpush1.msra.mxu0 %v138
    %165 = vmatprep.subr.mxu0 %v141
    %166 = vmatpush1.msra.mxu0 %v140
    %167 = vmatprep.subr.mxu0 %v143
    %168 = vmatpush1.msra.mxu0 %v142
    %169 = vmatprep.subr.mxu0 %v145
    %170 = vmatpush1.msra.mxu0 %v144
    %171 = vmatprep.subr.mxu0 0.0
    %172 = vmatpush1.msra.mxu0 0.0
    %173 = vmatprep.subr.mxu0 0.0
    %174 = vmatpush1.msra.mxu0 0.0
    %175 = vmatprep.subr.mxu0 0.0
    %176 = vmatpush1.msra.mxu0 0.0
    %177 = vmatprep.subr.mxu0 0.0
    %178 = vmatpush1.msra.mxu0 0.0
    %179 = vmatprep.subr.mxu0 0.0
    %180 = vmatpush1.msra.mxu0 0.0
    %181 = vmatprep.subr.mxu0 0.0
    %182 = vmatpush1.msra.mxu0 0.0
    %183 = vmatprep.subr.mxu0 0.0
    %184 = vmatpush1.msra.mxu0 0.0
    %185 = vmatprep.subr.mxu0 0.0
    %186 = vmatpush1.msra.mxu0 0.0
    %187 = vmatprep.subr.mxu0 0.0
    %188 = vmatpush1.msra.mxu0 0.0
    %189 = vmatprep.subr.mxu0 0.0
    %190 = vmatpush1.msra.mxu0 0.0
    %191 = vmatprep.subr.mxu0 0.0
    %192 = vmatpush1.msra.mxu0 0.0
    %193 = vmatprep.subr.mxu0 0.0
    %194 = vmatpush1.msra.mxu0 0.0
    %195 = vmatprep.subr.mxu0 0.0
    %196 = vmatpush1.msra.mxu0 0.0
    %197 = vmatprep.subr.mxu0 0.0
    %198 = vmatpush1.msra.mxu0 0.0
    %199 = vmatprep.subr.mxu0 0.0
    %200 = vmatpush1.msra.mxu0 0.0
    %201 = vmatprep.subr.mxu0 0.0
    %202 = vmatpush1.msra.mxu0 0.0
    %203 = vmatprep.subr.mxu0 0.0
    %204 = vmatpush1.msra.mxu0 0.0
    %205 = vmatprep.subr.mxu0 0.0
    %206 = vmatpush1.msra.mxu0 0.0
    %207 = vmatprep.subr.mxu0 0.0
    %208 = vmatpush1.msra.mxu0 0.0
    %209 = vmatprep.subr.mxu0 0.0
    %210 = vmatpush1.msra.mxu0 0.0
    %211 = vmatprep.subr.mxu0 0.0
    %212 = vmatpush1.msra.mxu0 0.0
    %213 = vmatprep.subr.mxu0 0.0
    %214 = vmatpush1.msra.mxu0 0.0
    %215 = vmatprep.subr.mxu0 0.0
    %216 = vmatpush1.msra.mxu0 0.0
    %217 = vmatprep.subr.mxu0 0.0
    %218 = vmatpush1.msra.mxu0 0.0
    %219 = vmatprep.mubr.f32.mxu0 0.0
    %220 = vmatmul.mubr.f32.gmra.mrb[0].mxu0 %v147
    %v221 = vpop.f32.mrb[0].mxu0
    %v222 = vadd.f32 0.0, %v221
    %v223 = vpop.f32.mrb[0].mxu0
    %v224 = vadd.f32 0.0, %v223
    %225 = vmatprep.mubr.f32.mxu0 0.0
    %226 = vmatmul.mubr.f32.gmra.mrb[0].mxu0 %v150
    %v227 = vpop.f32.mrb[0].mxu0
    %v228 = vadd.f32 0.0, %v227
    %v229 = vpop.f32.mrb[0].mxu0
    %v230 = vadd.f32 0.0, %v229
    %231 = vmatprep.mubr.f32.mxu0 0.0
    %232 = vmatmul.mubr.f32.gmra.mrb[0].mxu0 %v153
    %v233 = vpop.f32.mrb[0].mxu0
    %v234 = vadd.f32 0.0, %v233
    %v235 = vpop.f32.mrb[0].mxu0
    %v236 = vadd.f32 0.0, %v235
    %237 = vdwg.mxu0
    %v238 = vadd.f32 %v125, %v222
    %v239 = vadd.f32 %v126, %v224
    %v240 = vadd.f32 %v125, %v228
    %v241 = vadd.f32 %v126, %v230
    %v242 = vadd.f32 %v125, %v234
    %v243 = vadd.f32 %v126, %v236
    %v244 = vld [vmem:[#allocation2 + $0x1] sm:$0xff]
    %v245 = vld [vmem:[#allocation2 + $0x9] sm:$0xff]
    %v246 = vld [vmem:[#allocation2 + $0x11] sm:$0x3]
    %s247 = scalar_lea.vmem %s1, 128
    %v248 = vld [vmem:[%s247] sm:$0xff]
    %v249 = vld [vmem:[%s247 + $0x8] sm:$0xff]
    %v250 = vld [vmem:[%s247 + $0x10] sm:$0xff]
    %v251 = vld [vmem:[%s247 + $0x18] sm:$0xff]
    %v252 = vld [vmem:[%s247 + $0x20] sm:$0xff]
    %v253 = vld [vmem:[%s247 + $0x28] sm:$0xff]
    %v254 = vld [vmem:[%s247 + $0x30] sm:$0xff]
    %v255 = vld [vmem:[%s247 + $0x38] sm:$0xff]
    %v256 = vld [vmem:[%s247 + $0x40] sm:$0xff]
    %v257 = vld [vmem:[%s247 + $0x48] sm:$0xff]
    %v258 = vld [vmem:[%s247 + $0x50] sm:$0xff]
    %v259 = vld [vmem:[%s247 + $0x58] sm:$0xff]
    %v260 = vld [vmem:[%s247 + $0x60] sm:$0xff]
    %v261 = vld [vmem:[%s247 + $0x68] sm:$0xff]
    %v262 = vld [vmem:[%s247 + $0x70] sm:$0xff]
    %v263 = vld [vmem:[%s247 + $0x78] sm:$0xff]
    %v265 = vsel %vm99, %v244, 0
    %v268 = vsel %vm99, %v245, 0
    %v271 = vsel %vm99, %v246, 0
    %273 = vmatprep.subr.mxu0 %v249
    %274 = vmatpush1.msra.mxu0 %v248
    %275 = vmatprep.subr.mxu0 %v251
    %276 = vmatpush1.msra.mxu0 %v250
    %277 = vmatprep.subr.mxu0 %v253
    %278 = vmatpush1.msra.mxu0 %v252
    %279 = vmatprep.subr.mxu0 %v255
    %280 = vmatpush1.msra.mxu0 %v254
    %281 = vmatprep.subr.mxu0 %v257
    %282 = vmatpush1.msra.mxu0 %v256
    %283 = vmatprep.subr.mxu0 %v259
    %284 = vmatpush1.msra.mxu0 %v258
    %285 = vmatprep.subr.mxu0 %v261
    %286 = vmatpush1.msra.mxu0 %v260
    %287 = vmatprep.subr.mxu0 %v263
    %288 = vmatpush1.msra.mxu0 %v262
    %289 = vmatprep.subr.mxu0 0.0
    %290 = vmatpush1.msra.mxu0 0.0
    %291 = vmatprep.subr.mxu0 0.0
    %292 = vmatpush1.msra.mxu0 0.0
    %293 = vmatprep.subr.mxu0 0.0
    %294 = vmatpush1.msra.mxu0 0.0
    %295 = vmatprep.subr.mxu0 0.0
    %296 = vmatpush1.msra.mxu0 0.0
    %297 = vmatprep.subr.mxu0 0.0
    %298 = vmatpush1.msra.mxu0 0.0
    %299 = vmatprep.subr.mxu0 0.0
    %300 = vmatpush1.msra.mxu0 0.0
    %301 = vmatprep.subr.mxu0 0.0
    %302 = vmatpush1.msra.mxu0 0.0
    %303 = vmatprep.subr.mxu0 0.0
    %304 = vmatpush1.msra.mxu0 0.0
    %305 = vmatprep.subr.mxu0 0.0
    %306 = vmatpush1.msra.mxu0 0.0
    %307 = vmatprep.subr.mxu0 0.0
    %308 = vmatpush1.msra.mxu0 0.0
    %309 = vmatprep.subr.mxu0 0.0
    %310 = vmatpush1.msra.mxu0 0.0
    %311 = vmatprep.subr.mxu0 0.0
    %312 = vmatpush1.msra.mxu0 0.0
    %313 = vmatprep.subr.mxu0 0.0
    %314 = vmatpush1.msra.mxu0 0.0
    %315 = vmatprep.subr.mxu0 0.0
    %316 = vmatpush1.msra.mxu0 0.0
    %317 = vmatprep.subr.mxu0 0.0
    %318 = vmatpush1.msra.mxu0 0.0
    %319 = vmatprep.subr.mxu0 0.0
    %320 = vmatpush1.msra.mxu0 0.0
    %321 = vmatprep.subr.mxu0 0.0
    %322 = vmatpush1.msra.mxu0 0.0
    %323 = vmatprep.subr.mxu0 0.0
    %324 = vmatpush1.msra.mxu0 0.0
    %325 = vmatprep.subr.mxu0 0.0
    %326 = vmatpush1.msra.mxu0 0.0
    %327 = vmatprep.subr.mxu0 0.0
    %328 = vmatpush1.msra.mxu0 0.0
    %329 = vmatprep.subr.mxu0 0.0
    %330 = vmatpush1.msra.mxu0 0.0
    %331 = vmatprep.subr.mxu0 0.0
    %332 = vmatpush1.msra.mxu0 0.0
    %333 = vmatprep.subr.mxu0 0.0
    %334 = vmatpush1.msra.mxu0 0.0
    %335 = vmatprep.subr.mxu0 0.0
    %336 = vmatpush1.msra.mxu0 0.0
    %337 = vmatprep.mubr.f32.mxu0 0.0
    %338 = vmatmul.mubr.f32.gmra.mrb[0].mxu0 %v265
    %v339 = vpop.f32.mrb[0].mxu0
    %v340 = vadd.f32 0.0, %v339
    %v341 = vpop.f32.mrb[0].mxu0
    %v342 = vadd.f32 0.0, %v341
    %343 = vmatprep.mubr.f32.mxu0 0.0
    %344 = vmatmul.mubr.f32.gmra.mrb[0].mxu0 %v268
    %v345 = vpop.f32.mrb[0].mxu0
    %v346 = vadd.f32 0.0, %v345
    %v347 = vpop.f32.mrb[0].mxu0
    %v348 = vadd.f32 0.0, %v347
    %349 = vmatprep.mubr.f32.mxu0 0.0
    %350 = vmatmul.mubr.f32.gmra.mrb[0].mxu0 %v271
    %v351 = vpop.f32.mrb[0].mxu0
    %v352 = vadd.f32 0.0, %v351
    %v353 = vpop.f32.mrb[0].mxu0
    %v354 = vadd.f32 0.0, %v353
    %355 = vdwg.mxu0
    %v356 = vadd.f32 %v238, %v340
    %v357 = vadd.f32 %v239, %v342
    %v358 = vadd.f32 %v240, %v346
    %v359 = vadd.f32 %v241, %v348
    %v360 = vadd.f32 %v242, %v352
    %v361 = vadd.f32 %v243, %v354
    %v362 = vld [vmem:[#allocation2 + $0x2] sm:$0xff]
    %v363 = vld [vmem:[#allocation2 + $0xa] sm:$0xff]
    %v364 = vld [vmem:[#allocation2 + $0x12] sm:$0x3]
    %s365 = scalar_lea.vmem %s1, 256
    %v366 = vld [vmem:[%s365] sm:$0xff]
    %v367 = vld [vmem:[%s365 + $0x8] sm:$0xff]
    %v368 = vld [vmem:[%s365 + $0x10] sm:$0xff]
    %v369 = vld [vmem:[%s365 + $0x18] sm:$0xff]
    %v370 = vld [vmem:[%s365 + $0x20] sm:$0xff]
    %v371 = vld [vmem:[%s365 + $0x28] sm:$0xff]
    %v372 = vld [vmem:[%s365 + $0x30] sm:$0xff]
    %v373 = vld [vmem:[%s365 + $0x38] sm:$0xff]
    %v374 = vld [vmem:[%s365 + $0x40] sm:$0xff]
    %v375 = vld [vmem:[%s365 + $0x48] sm:$0xff]
    %v376 = vld [vmem:[%s365 + $0x50] sm:$0xff]
    %v377 = vld [vmem:[%s365 + $0x58] sm:$0xff]
    %v378 = vld [vmem:[%s365 + $0x60] sm:$0xff]
    %v379 = vld [vmem:[%s365 + $0x68] sm:$0xff]
    %v380 = vld [vmem:[%s365 + $0x70] sm:$0xff]
    %v381 = vld [vmem:[%s365 + $0x78] sm:$0xff]
    %v383 = vsel %vm99, %v362, 0
    %v386 = vsel %vm99, %v363, 0
    %v389 = vsel %vm99, %v364, 0
    %391 = vmatprep.subr.mxu0 %v367
    %392 = vmatpush1.msra.mxu0 %v366
    %393 = vmatprep.subr.mxu0 %v369
    %394 = vmatpush1.msra.mxu0 %v368
    %395 = vmatprep.subr.mxu0 %v371
    %396 = vmatpush1.msra.mxu0 %v370
    %397 = vmatprep.subr.mxu0 %v373
    %398 = vmatpush1.msra.mxu0 %v372
    %399 = vmatprep.subr.mxu0 %v375
    %400 = vmatpush1.msra.mxu0 %v374
    %401 = vmatprep.subr.mxu0 %v377
    %402 = vmatpush1.msra.mxu0 %v376
    %403 = vmatprep.subr.mxu0 %v379
    %404 = vmatpush1.msra.mxu0 %v378
    %405 = vmatprep.subr.mxu0 %v381
    %406 = vmatpush1.msra.mxu0 %v380
    %407 = vmatprep.subr.mxu0 0.0
    %408 = vmatpush1.msra.mxu0 0.0
    %409 = vmatprep.subr.mxu0 0.0
    %410 = vmatpush1.msra.mxu0 0.0
    %411 = vmatprep.subr.mxu0 0.0
    %412 = vmatpush1.msra.mxu0 0.0
    %413 = vmatprep.subr.mxu0 0.0
    %414 = vmatpush1.msra.mxu0 0.0
    %415 = vmatprep.subr.mxu0 0.0
    %416 = vmatpush1.msra.mxu0 0.0
    %417 = vmatprep.subr.mxu0 0.0
    %418 = vmatpush1.msra.mxu0 0.0
    %419 = vmatprep.subr.mxu0 0.0
    %420 = vmatpush1.msra.mxu0 0.0
    %421 = vmatprep.subr.mxu0 0.0
    %422 = vmatpush1.msra.mxu0 0.0
    %423 = vmatprep.subr.mxu0 0.0
    %424 = vmatpush1.msra.mxu0 0.0
    %425 = vmatprep.subr.mxu0 0.0
    %426 = vmatpush1.msra.mxu0 0.0
    %427 = vmatprep.subr.mxu0 0.0
    %428 = vmatpush1.msra.mxu0 0.0
    %429 = vmatprep.subr.mxu0 0.0
    %430 = vmatpush1.msra.mxu0 0.0
    %431 = vmatprep.subr.mxu0 0.0
    %432 = vmatpush1.msra.mxu0 0.0
    %433 = vmatprep.subr.mxu0 0.0
    %434 = vmatpush1.msra.mxu0 0.0
    %435 = vmatprep.subr.mxu0 0.0
    %436 = vmatpush1.msra.mxu0 0.0
    %437 = vmatprep.subr.mxu0 0.0
    %438 = vmatpush1.msra.mxu0 0.0
    %439 = vmatprep.subr.mxu0 0.0
    %440 = vmatpush1.msra.mxu0 0.0
    %441 = vmatprep.subr.mxu0 0.0
    %442 = vmatpush1.msra.mxu0 0.0
    %443 = vmatprep.subr.mxu0 0.0
    %444 = vmatpush1.msra.mxu0 0.0
    %445 = vmatprep.subr.mxu0 0.0
    %446 = vmatpush1.msra.mxu0 0.0
    %447 = vmatprep.subr.mxu0 0.0
    %448 = vmatpush1.msra.mxu0 0.0
    %449 = vmatprep.subr.mxu0 0.0
    %450 = vmatpush1.msra.mxu0 0.0
    %451 = vmatprep.subr.mxu0 0.0
    %452 = vmatpush1.msra.mxu0 0.0
    %453 = vmatprep.subr.mxu0 0.0
    %454 = vmatpush1.msra.mxu0 0.0
    %455 = vmatprep.mubr.f32.mxu0 0.0
    %456 = vmatmul.mubr.f32.gmra.mrb[0].mxu0 %v383
    %v457 = vpop.f32.mrb[0].mxu0
    %v458 = vadd.f32 0.0, %v457
    %v459 = vpop.f32.mrb[0].mxu0
    %v460 = vadd.f32 0.0, %v459
    %461 = vmatprep.mubr.f32.mxu0 0.0
    %462 = vmatmul.mubr.f32.gmra.mrb[0].mxu0 %v386
    %v463 = vpop.f32.mrb[0].mxu0
    %v464 = vadd.f32 0.0, %v463
    %v465 = vpop.f32.mrb[0].mxu0
    %v466 = vadd.f32 0.0, %v465
    %467 = vmatprep.mubr.f32.mxu0 0.0
    %468 = vmatmul.mubr.f32.gmra.mrb[0].mxu0 %v389
    %v469 = vpop.f32.mrb[0].mxu0
    %v470 = vadd.f32 0.0, %v469
    %v471 = vpop.f32.mrb[0].mxu0
    %v472 = vadd.f32 0.0, %v471
    %473 = vdwg.mxu0
    %v474 = vadd.f32 %v356, %v458
    %v475 = vadd.f32 %v357, %v460
    %v476 = vadd.f32 %v358, %v464
    %v477 = vadd.f32 %v359, %v466
    %v478 = vadd.f32 %v360, %v470
    %v479 = vadd.f32 %v361, %v472
    %v480 = vld [vmem:[#allocation2 + $0x14] sm:$0xff]
    %v481 = vld [vmem:[#allocation2 + $0x1c] sm:$0xff]
    %v482 = vld [vmem:[#allocation2 + $0x24] sm:$0x3]
    %v484 = vsel %vm99, %v480, 0
    %v487 = vsel %vm99, %v481, 0
    %v490 = vsel %vm99, %v482, 0
    %492 = vmatprep.subr.mxu0 %v131
    %493 = vmatpush1.msra.mxu0 %v130
    %494 = vmatprep.subr.mxu0 %v133
    %495 = vmatpush1.msra.mxu0 %v132
    %496 = vmatprep.subr.mxu0 %v135
    %497 = vmatpush1.msra.mxu0 %v134
    %498 = vmatprep.subr.mxu0 %v137
    %499 = vmatpush1.msra.mxu0 %v136
    %500 = vmatprep.subr.mxu0 %v139
    %501 = vmatpush1.msra.mxu0 %v138
    %502 = vmatprep.subr.mxu0 %v141
    %503 = vmatpush1.msra.mxu0 %v140
    %504 = vmatprep.subr.mxu0 %v143
    %505 = vmatpush1.msra.mxu0 %v142
    %506 = vmatprep.subr.mxu0 %v145
    %507 = vmatpush1.msra.mxu0 %v144
    %508 = vmatprep.subr.mxu0 0.0
    %509 = vmatpush1.msra.mxu0 0.0
    %510 = vmatprep.subr.mxu0 0.0
    %511 = vmatpush1.msra.mxu0 0.0
    %512 = vmatprep.subr.mxu0 0.0
    %513 = vmatpush1.msra.mxu0 0.0
    %514 = vmatprep.subr.mxu0 0.0
    %515 = vmatpush1.msra.mxu0 0.0
    %516 = vmatprep.subr.mxu0 0.0
    %517 = vmatpush1.msra.mxu0 0.0
    %518 = vmatprep.subr.mxu0 0.0
    %519 = vmatpush1.msra.mxu0 0.0
    %520 = vmatprep.subr.mxu0 0.0
    %521 = vmatpush1.msra.mxu0 0.0
    %522 = vmatprep.subr.mxu0 0.0
    %523 = vmatpush1.msra.mxu0 0.0
    %524 = vmatprep.subr.mxu0 0.0
    %525 = vmatpush1.msra.mxu0 0.0
    %526 = vmatprep.subr.mxu0 0.0
    %527 = vmatpush1.msra.mxu0 0.0
    %528 = vmatprep.subr.mxu0 0.0
    %529 = vmatpush1.msra.mxu0 0.0
    %530 = vmatprep.subr.mxu0 0.0
    %531 = vmatpush1.msra.mxu0 0.0
    %532 = vmatprep.subr.mxu0 0.0
    %533 = vmatpush1.msra.mxu0 0.0
    %534 = vmatprep.subr.mxu0 0.0
    %535 = vmatpush1.msra.mxu0 0.0
    %536 = vmatprep.subr.mxu0 0.0
    %537 = vmatpush1.msra.mxu0 0.0
    %538 = vmatprep.subr.mxu0 0.0
    %539 = vmatpush1.msra.mxu0 0.0
    %540 = vmatprep.subr.mxu0 0.0
    %541 = vmatpush1.msra.mxu0 0.0
    %542 = vmatprep.subr.mxu0 0.0
    %543 = vmatpush1.msra.mxu0 0.0
    %544 = vmatprep.subr.mxu0 0.0
    %545 = vmatpush1.msra.mxu0 0.0
    %546 = vmatprep.subr.mxu0 0.0
    %547 = vmatpush1.msra.mxu0 0.0
    %548 = vmatprep.subr.mxu0 0.0
    %549 = vmatpush1.msra.mxu0 0.0
    %550 = vmatprep.subr.mxu0 0.0
    %551 = vmatpush1.msra.mxu0 0.0
    %552 = vmatprep.subr.mxu0 0.0
    %553 = vmatpush1.msra.mxu0 0.0
    %554 = vmatprep.subr.mxu0 0.0
    %555 = vmatpush1.msra.mxu0 0.0
    %556 = vmatprep.mubr.f32.mxu0 0.0
    %557 = vmatmul.mubr.f32.gmra.mrb[0].mxu0 %v484
    %v558 = vpop.f32.mrb[0].mxu0
    %v559 = vadd.f32 0.0, %v558
    %v560 = vpop.f32.mrb[0].mxu0
    %v561 = vadd.f32 0.0, %v560
    %562 = vmatprep.mubr.f32.mxu0 0.0
    %563 = vmatmul.mubr.f32.gmra.mrb[0].mxu0 %v487
    %v564 = vpop.f32.mrb[0].mxu0
    %v565 = vadd.f32 0.0, %v564
    %v566 = vpop.f32.mrb[0].mxu0
    %v567 = vadd.f32 0.0, %v566
    %568 = vmatprep.mubr.f32.mxu0 0.0
    %569 = vmatmul.mubr.f32.gmra.mrb[0].mxu0 %v490
    %v570 = vpop.f32.mrb[0].mxu0
    %v571 = vadd.f32 0.0, %v570
    %v572 = vpop.f32.mrb[0].mxu0
    %v573 = vadd.f32 0.0, %v572
    %574 = vdwg.mxu0
    %v575 = vadd.f32 %v125, %v559
    %v576 = vadd.f32 %v126, %v561
    %v577 = vadd.f32 %v125, %v565
    %v578 = vadd.f32 %v126, %v567
    %v579 = vadd.f32 %v125, %v571
    %v580 = vadd.f32 %v126, %v573
    %v581 = vld [vmem:[#allocation2 + $0x15] sm:$0xff]
    %v582 = vld [vmem:[#allocation2 + $0x1d] sm:$0xff]
    %v583 = vld [vmem:[#allocation2 + $0x25] sm:$0x3]
    %v585 = vsel %vm99, %v581, 0
    %v588 = vsel %vm99, %v582, 0
    %v591 = vsel %vm99, %v583, 0
    %593 = vmatprep.subr.mxu0 %v249
    %594 = vmatpush1.msra.mxu0 %v248
    %595 = vmatprep.subr.mxu0 %v251
    %596 = vmatpush1.msra.mxu0 %v250
    %597 = vmatprep.subr.mxu0 %v253
    %598 = vmatpush1.msra.mxu0 %v252
    %599 = vmatprep.subr.mxu0 %v255
    %600 = vmatpush1.msra.mxu0 %v254
    %601 = vmatprep.subr.mxu0 %v257
    %602 = vmatpush1.msra.mxu0 %v256
    %603 = vmatprep.subr.mxu0 %v259
    %604 = vmatpush1.msra.mxu0 %v258
    %605 = vmatprep.subr.mxu0 %v261
    %606 = vmatpush1.msra.mxu0 %v260
    %607 = vmatprep.subr.mxu0 %v263
    %608 = vmatpush1.msra.mxu0 %v262
    %609 = vmatprep.subr.mxu0 0.0
    %610 = vmatpush1.msra.mxu0 0.0
    %611 = vmatprep.subr.mxu0 0.0
    %612 = vmatpush1.msra.mxu0 0.0
    %613 = vmatprep.subr.mxu0 0.0
    %614 = vmatpush1.msra.mxu0 0.0
    %615 = vmatprep.subr.mxu0 0.0
    %616 = vmatpush1.msra.mxu0 0.0
    %617 = vmatprep.subr.mxu0 0.0
    %618 = vmatpush1.msra.mxu0 0.0
    %619 = vmatprep.subr.mxu0 0.0
    %620 = vmatpush1.msra.mxu0 0.0
    %621 = vmatprep.subr.mxu0 0.0
    %622 = vmatpush1.msra.mxu0 0.0
    %623 = vmatprep.subr.mxu0 0.0
    %624 = vmatpush1.msra.mxu0 0.0
    %625 = vmatprep.subr.mxu0 0.0
    %626 = vmatpush1.msra.mxu0 0.0
    %627 = vmatprep.subr.mxu0 0.0
    %628 = vmatpush1.msra.mxu0 0.0
    %629 = vmatprep.subr.mxu0 0.0
    %630 = vmatpush1.msra.mxu0 0.0
    %631 = vmatprep.subr.mxu0 0.0
    %632 = vmatpush1.msra.mxu0 0.0
    %633 = vmatprep.subr.mxu0 0.0
    %634 = vmatpush1.msra.mxu0 0.0
    %635 = vmatprep.subr.mxu0 0.0
    %636 = vmatpush1.msra.mxu0 0.0
    %637 = vmatprep.subr.mxu0 0.0
    %638 = vmatpush1.msra.mxu0 0.0
    %639 = vmatprep.subr.mxu0 0.0
    %640 = vmatpush1.msra.mxu0 0.0
    %641 = vmatprep.subr.mxu0 0.0
    %642 = vmatpush1.msra.mxu0 0.0
    %643 = vmatprep.subr.mxu0 0.0
    %644 = vmatpush1.msra.mxu0 0.0
    %645 = vmatprep.subr.mxu0 0.0
    %646 = vmatpush1.msra.mxu0 0.0
    %647 = vmatprep.subr.mxu0 0.0
    %648 = vmatpush1.msra.mxu0 0.0
    %649 = vmatprep.subr.mxu0 0.0
    %650 = vmatpush1.msra.mxu0 0.0
    %651 = vmatprep.subr.mxu0 0.0
    %652 = vmatpush1.msra.mxu0 0.0
    %653 = vmatprep.subr.mxu0 0.0
    %654 = vmatpush1.msra.mxu0 0.0
    %655 = vmatprep.subr.mxu0 0.0
    %656 = vmatpush1.msra.mxu0 0.0
    %657 = vmatprep.mubr.f32.mxu0 0.0
    %658 = vmatmul.mubr.f32.gmra.mrb[0].mxu0 %v585
    %v659 = vpop.f32.mrb[0].mxu0
    %v660 = vadd.f32 0.0, %v659
    %v661 = vpop.f32.mrb[0].mxu0
    %v662 = vadd.f32 0.0, %v661
    %663 = vmatprep.mubr.f32.mxu0 0.0
    %664 = vmatmul.mubr.f32.gmra.mrb[0].mxu0 %v588
    %v665 = vpop.f32.mrb[0].mxu0
    %v666 = vadd.f32 0.0, %v665
    %v667 = vpop.f32.mrb[0].mxu0
    %v668 = vadd.f32 0.0, %v667
    %669 = vmatprep.mubr.f32.mxu0 0.0
    %670 = vmatmul.mubr.f32.gmra.mrb[0].mxu0 %v591
    %v671 = vpop.f32.mrb[0].mxu0
    %v672 = vadd.f32 0.0, %v671
    %v673 = vpop.f32.mrb[0].mxu0
    %v674 = vadd.f32 0.0, %v673
    %675 = vdwg.mxu0
    %v676 = vadd.f32 %v575, %v660
    %v677 = vadd.f32 %v576, %v662
    %v678 = vadd.f32 %v577, %v666
    %v679 = vadd.f32 %v578, %v668
    %v680 = vadd.f32 %v579, %v672
    %v681 = vadd.f32 %v580, %v674
    %v682 = vld [vmem:[#allocation2 + $0x16] sm:$0xff]
    %v683 = vld [vmem:[#allocation2 + $0x1e] sm:$0xff]
    %v684 = vld [vmem:[#allocation2 + $0x26] sm:$0x3]
    %v686 = vsel %vm99, %v682, 0
    %v689 = vsel %vm99, %v683, 0
    %v692 = vsel %vm99, %v684, 0
    %694 = vmatprep.subr.mxu0 %v367
    %695 = vmatpush1.msra.mxu0 %v366
    %696 = vmatprep.subr.mxu0 %v369
    %697 = vmatpush1.msra.mxu0 %v368
    %698 = vmatprep.subr.mxu0 %v371
    %699 = vmatpush1.msra.mxu0 %v370
    %700 = vmatprep.subr.mxu0 %v373
    %701 = vmatpush1.msra.mxu0 %v372
    %702 = vmatprep.subr.mxu0 %v375
    %703 = vmatpush1.msra.mxu0 %v374
    %704 = vmatprep.subr.mxu0 %v377
    %705 = vmatpush1.msra.mxu0 %v376
    %706 = vmatprep.subr.mxu0 %v379
    %707 = vmatpush1.msra.mxu0 %v378
    %708 = vmatprep.subr.mxu0 %v381
    %709 = vmatpush1.msra.mxu0 %v380
    %710 = vmatprep.subr.mxu0 0.0
    %711 = vmatpush1.msra.mxu0 0.0
    %712 = vmatprep.subr.mxu0 0.0
    %713 = vmatpush1.msra.mxu0 0.0
    %714 = vmatprep.subr.mxu0 0.0
    %715 = vmatpush1.msra.mxu0 0.0
    %716 = vmatprep.subr.mxu0 0.0
    %717 = vmatpush1.msra.mxu0 0.0
    %718 = vmatprep.subr.mxu0 0.0
    %719 = vmatpush1.msra.mxu0 0.0
    %720 = vmatprep.subr.mxu0 0.0
    %721 = vmatpush1.msra.mxu0 0.0
    %722 = vmatprep.subr.mxu0 0.0
    %723 = vmatpush1.msra.mxu0 0.0
    %724 = vmatprep.subr.mxu0 0.0
    %725 = vmatpush1.msra.mxu0 0.0
    %726 = vmatprep.subr.mxu0 0.0
    %727 = vmatpush1.msra.mxu0 0.0
    %728 = vmatprep.subr.mxu0 0.0
    %729 = vmatpush1.msra.mxu0 0.0
    %730 = vmatprep.subr.mxu0 0.0
    %731 = vmatpush1.msra.mxu0 0.0
    %732 = vmatprep.subr.mxu0 0.0
    %733 = vmatpush1.msra.mxu0 0.0
    %734 = vmatprep.subr.mxu0 0.0
    %735 = vmatpush1.msra.mxu0 0.0
    %736 = vmatprep.subr.mxu0 0.0
    %737 = vmatpush1.msra.mxu0 0.0
    %738 = vmatprep.subr.mxu0 0.0
    %739 = vmatpush1.msra.mxu0 0.0
    %740 = vmatprep.subr.mxu0 0.0
    %741 = vmatpush1.msra.mxu0 0.0
    %742 = vmatprep.subr.mxu0 0.0
    %743 = vmatpush1.msra.mxu0 0.0
    %744 = vmatprep.subr.mxu0 0.0
    %745 = vmatpush1.msra.mxu0 0.0
    %746 = vmatprep.subr.mxu0 0.0
    %747 = vmatpush1.msra.mxu0 0.0
    %748 = vmatprep.subr.mxu0 0.0
    %749 = vmatpush1.msra.mxu0 0.0
    %750 = vmatprep.subr.mxu0 0.0
    %751 = vmatpush1.msra.mxu0 0.0
    %752 = vmatprep.subr.mxu0 0.0
    %753 = vmatpush1.msra.mxu0 0.0
    %754 = vmatprep.subr.mxu0 0.0
    %755 = vmatpush1.msra.mxu0 0.0
    %756 = vmatprep.subr.mxu0 0.0
    %757 = vmatpush1.msra.mxu0 0.0
    %758 = vmatprep.mubr.f32.mxu0 0.0
    %759 = vmatmul.mubr.f32.gmra.mrb[0].mxu0 %v686
    %v760 = vpop.f32.mrb[0].mxu0
    %v761 = vadd.f32 0.0, %v760
    %v762 = vpop.f32.mrb[0].mxu0
    %v763 = vadd.f32 0.0, %v762
    %764 = vmatprep.mubr.f32.mxu0 0.0
    %765 = vmatmul.mubr.f32.gmra.mrb[0].mxu0 %v689
    %v766 = vpop.f32.mrb[0].mxu0
    %v767 = vadd.f32 0.0, %v766
    %v768 = vpop.f32.mrb[0].mxu0
    %v769 = vadd.f32 0.0, %v768
    %770 = vmatprep.mubr.f32.mxu0 0.0
    %771 = vmatmul.mubr.f32.gmra.mrb[0].mxu0 %v692
    %v772 = vpop.f32.mrb[0].mxu0
    %v773 = vadd.f32 0.0, %v772
    %v774 = vpop.f32.mrb[0].mxu0
    %v775 = vadd.f32 0.0, %v774
    %776 = vdwg.mxu0
    %v777 = vadd.f32 %v676, %v761
    %v778 = vadd.f32 %v677, %v763
    %v779 = vadd.f32 %v678, %v767
    %v780 = vadd.f32 %v679, %v769
    %v781 = vadd.f32 %v680, %v773
    %v782 = vadd.f32 %v681, %v775
    %783 = vst [vmem:[#allocation3] sm:$0xff] 0.0
    %vm784 = vcmask 130048
    %785 = vst.msk [vmem:[#allocation3 + $0x8] sm:$0xff] %vm784, 0.0
    %786 = vst [vmem:[#allocation3 + $0x10] sm:$0xff] 0.0
    %787 = vst.msk [vmem:[#allocation3 + $0x18] sm:$0xff] %vm784, 0.0
    %788 = vst [vmem:[#allocation3 + $0x20] sm:$0xff] 0.0
    %789 = vst.msk [vmem:[#allocation3 + $0x28] sm:$0xff] %vm784, 0.0
    %790 = vst [vmem:[#allocation3 + $0x30] sm:$0xff] 0.0
    %791 = vst.msk [vmem:[#allocation3 + $0x38] sm:$0xff] %vm784, 0.0
    %792 = vst [vmem:[#allocation3 + $0x40] sm:$0xff] 0.0
    %793 = vst.msk [vmem:[#allocation3 + $0x48] sm:$0xff] %vm784, 0.0
    %v794 = vld [vmem:[%s4] sm:$0x3]
    %v795 = vld [vmem:[%s5] sm:$0x3]
    %v796 = vadd.f32 %v474, %v476
    %vm797 = vcmask 1041408
    %v798 = vsel %vm797, %v478, 0.0
    %v799 = vadd.f32 %v796, %v798
    %v800 = vrot.slane %v799, 4
    %v801 = vadd.f32 %v799, %v800
    %v802 = vrot.slane %v801, 2
    %v803 = vadd.f32 %v801, %v802
    %v804 = vrot.slane %v803, 1
    %v805 = vadd.f32 %v803, %v804
    %v806 = vsel %vm784, %v475, 0.0
    %v807 = vsel %vm784, %v477, 0.0
    %v808 = vadd.f32 %v806, %v807
    %vm809 = vcmask 123904
    %v810 = vsel %vm809, %v479, 0.0
    %v811 = vadd.f32 %v808, %v810
    %v812 = vrot.slane %v811, 4
    %v813 = vadd.f32 %v811, %v812
    %v814 = vrot.slane %v813, 2
    %v815 = vadd.f32 %v813, %v814
    %v816 = vrot.slane %v815, 1
    %v817 = vadd.f32 %v815, %v816
    %v818 = vadd.f32 %v805, 0.0
    %v819 = vadd.f32 %v817, 0.0
    %v820 = vadd.f32 %v777, %v779
    %v821 = vsel %vm797, %v781, 0.0
    %v822 = vadd.f32 %v820, %v821
    %v823 = vrot.slane %v822, 4
    %v824 = vadd.f32 %v822, %v823
    %v825 = vrot.slane %v824, 2
    %v826 = vadd.f32 %v824, %v825
    %v827 = vrot.slane %v826, 1
    %v828 = vadd.f32 %v826, %v827
    %v829 = vsel %vm784, %v778, 0.0
    %v830 = vsel %vm784, %v780, 0.0
    %v831 = vadd.f32 %v829, %v830
    %v832 = vsel %vm809, %v782, 0.0
    %v833 = vadd.f32 %v831, %v832
    %v834 = vrot.slane %v833, 4
    %v835 = vadd.f32 %v833, %v834
    %v836 = vrot.slane %v835, 2
    %v837 = vadd.f32 %v835, %v836
    %v838 = vrot.slane %v837, 1
    %v839 = vadd.f32 %v837, %v838
    %v840 = vadd.f32 %v818, %v828
    %v841 = vadd.f32 %v819, %v839
    %v843 = vsel %vm784, %v841, 0
    %845 = vmatprep.subr.mxu0 %v64
    %846 = vmatpush1.msra.mxu0 %v63
    %847 = vmatprep.subr.mxu0 %v66
    %848 = vmatpush1.msra.mxu0 %v65
    %849 = vmatprep.subr.mxu0 %v68
    %850 = vmatpush1.msra.mxu0 %v67
    %851 = vmatprep.subr.mxu0 %v70
    %852 = vmatpush1.msra.mxu0 %v69
    %853 = vmatprep.subr.mxu0 %v72
    %854 = vmatpush1.msra.mxu0 %v71
    %855 = vmatprep.subr.mxu0 %v74
    %856 = vmatpush1.msra.mxu0 %v73
    %857 = vmatprep.subr.mxu0 %v76
    %858 = vmatpush1.msra.mxu0 %v75
    %859 = vmatprep.subr.mxu0 %v78
    %860 = vmatpush1.msra.mxu0 %v77
    %861 = vmatprep.subr.mxu0 %v80
    %862 = vmatpush1.msra.mxu0 %v79
    %863 = vmatprep.subr.mxu0 %v82
    %864 = vmatpush1.msra.mxu0 %v81
    %865 = vmatprep.subr.mxu0 %v84
    %866 = vmatpush1.msra.mxu0 %v83
    %867 = vmatprep.subr.mxu0 %v86
    %868 = vmatpush1.msra.mxu0 %v85
    %869 = vmatprep.subr.mxu0 %v88
    %870 = vmatpush1.msra.mxu0 %v87
    %871 = vmatprep.subr.mxu0 %v90
    %872 = vmatpush1.msra.mxu0 %v89
    %873 = vmatprep.subr.mxu0 %v92
    %874 = vmatpush1.msra.mxu0 %v91
    %875 = vmatprep.subr.mxu0 %v94
    %876 = vmatpush1.msra.mxu0 %v93
    %877 = vmatprep.subr.mxu0 %v96
    %878 = vmatpush1.msra.mxu0 %v95
    %879 = vmatprep.subr.mxu0 %v98
    %880 = vmatpush1.msra.mxu0 %v97
    %881 = vmatprep.subr.mxu0 0.0
    %882 = vmatpush1.msra.mxu0 0.0
    %883 = vmatprep.subr.mxu0 0.0
    %884 = vmatpush1.msra.mxu0 0.0
    %885 = vmatprep.subr.mxu0 0.0
    %886 = vmatpush1.msra.mxu0 0.0
    %887 = vmatprep.subr.mxu0 0.0
    %888 = vmatpush1.msra.mxu0 0.0
    %889 = vmatprep.subr.mxu0 0.0
    %890 = vmatpush1.msra.mxu0 0.0
    %891 = vmatprep.subr.mxu0 0.0
    %892 = vmatpush1.msra.mxu0 0.0
    %893 = vmatprep.subr.mxu0 0.0
    %894 = vmatpush1.msra.mxu0 0.0
    %895 = vmatprep.subr.mxu0 0.0
    %896 = vmatpush1.msra.mxu0 0.0
    %897 = vmatprep.subr.mxu0 0.0
    %898 = vmatpush1.msra.mxu0 0.0
    %899 = vmatprep.subr.mxu0 0.0
    %900 = vmatpush1.msra.mxu0 0.0
    %901 = vmatprep.subr.mxu0 0.0
    %902 = vmatpush1.msra.mxu0 0.0
    %903 = vmatprep.subr.mxu0 0.0
    %904 = vmatpush1.msra.mxu0 0.0
    %905 = vmatprep.subr.mxu0 0.0
    %906 = vmatpush1.msra.mxu0 0.0
    %907 = vmatprep.subr.mxu0 0.0
    %908 = vmatpush1.msra.mxu0 0.0
    %909 = vmatprep.mubr.f32.mxu0 %v843
    %910 = vmatmul.mubr.f32.gmra.mrb[0].mxu0 %v840
    %v911 = vpop.f32.mrb[0].mxu0
    %v912 = vadd.f32 0.0, %v911
    %v913 = vpop.f32.mrb[0].mxu0
    %v914 = vadd.f32 0.0, %v913
    %915 = vdwg.mxu0
    %v916 = vmul.f32 %v912, 0.0015432099
    %v917 = vmul.f32 %v914, 0.0015432099
    %v918 = vlaneseq
    %v919 = vshrl.u32 %v918, 7
    %v920 = vsub.s32 0, %v919
    %v921 = vrot.slane %v916, %v920
    %v922 = vlaneseq
    %v923 = vshrl.u32 %v922, 7
    %v924 = vsub.s32 0, %v923
    %v925 = vrot.slane %v917, %v924
    %v926 = vsub.f32 %v474, %v921
    %v927 = vsub.f32 %v475, %v925
    %v928 = vsub.f32 %v476, %v921
    %v929 = vsub.f32 %v477, %v925
    %v930 = vsub.f32 %v478, %v921
    %v931 = vsub.f32 %v479, %v925
    %v932 = vmul.f32 %v926, %v926
    %v933 = vmul.f32 %v927, %v927
    %v934 = vmul.f32 %v928, %v928
    %v935 = vmul.f32 %v929, %v929
    %v936 = vmul.f32 %v930, %v930
    %v937 = vmul.f32 %v931, %v931
    %v938 = vadd.f32 %v932, %v934
    %v939 = vsel %vm797, %v936, 0.0
    %v940 = vadd.f32 %v938, %v939
    %v941 = vrot.slane %v940, 4
    %v942 = vadd.f32 %v940, %v941
    %v943 = vrot.slane %v942, 2
    %v944 = vadd.f32 %v942, %v943
    %v945 = vrot.slane %v944, 1
    %v946 = vadd.f32 %v944, %v945
    %v947 = vsel %vm784, %v933, 0.0
    %v948 = vsel %vm784, %v935, 0.0
    %v949 = vadd.f32 %v947, %v948
    %v950 = vsel %vm809, %v937, 0.0
    %v951 = vadd.f32 %v949, %v950
    %v952 = vrot.slane %v951, 4
    %v953 = vadd.f32 %v951, %v952
    %v954 = vrot.slane %v953, 2
    %v955 = vadd.f32 %v953, %v954
    %v956 = vrot.slane %v955, 1
    %v957 = vadd.f32 %v955, %v956
    %v958 = vadd.f32 %v946, 0.0
    %v959 = vadd.f32 %v957, 0.0
    %v960 = vsub.f32 %v777, %v921
    %v961 = vsub.f32 %v778, %v925
    %v962 = vsub.f32 %v779, %v921
    %v963 = vsub.f32 %v780, %v925
    %v964 = vsub.f32 %v781, %v921
    %v965 = vsub.f32 %v782, %v925
    %v966 = vmul.f32 %v960, %v960
    %v967 = vmul.f32 %v961, %v961
    %v968 = vmul.f32 %v962, %v962
    %v969 = vmul.f32 %v963, %v963
    %v970 = vmul.f32 %v964, %v964
    %v971 = vmul.f32 %v965, %v965
    %v972 = vadd.f32 %v966, %v968
    %v973 = vsel %vm797, %v970, 0.0
    %v974 = vadd.f32 %v972, %v973
    %v975 = vrot.slane %v974, 4
    %v976 = vadd.f32 %v974, %v975
    %v977 = vrot.slane %v976, 2
    %v978 = vadd.f32 %v976, %v977
    %v979 = vrot.slane %v978, 1
    %v980 = vadd.f32 %v978, %v979
    %v981 = vsel %vm784, %v967, 0.0
    %v982 = vsel %vm784, %v969, 0.0
    %v983 = vadd.f32 %v981, %v982
    %v984 = vsel %vm809, %v971, 0.0
    %v985 = vadd.f32 %v983, %v984
    %v986 = vrot.slane %v985, 4
    %v987 = vadd.f32 %v985, %v986
    %v988 = vrot.slane %v987, 2
    %v989 = vadd.f32 %v987, %v988
    %v990 = vrot.slane %v989, 1
    %v991 = vadd.f32 %v989, %v990
    %v992 = vadd.f32 %v958, %v980
    %v993 = vadd.f32 %v959, %v991
    %v995 = vsel %vm784, %v993, 0
    %997 = vmatprep.subr.mxu0 %v64
    %998 = vmatpush1.msra.mxu0 %v63
    %999 = vmatprep.subr.mxu0 %v66
    %1000 = vmatpush1.msra.mxu0 %v65
    %1001 = vmatprep.subr.mxu0 %v68
    %1002 = vmatpush1.msra.mxu0 %v67
    %1003 = vmatprep.subr.mxu0 %v70
    %1004 = vmatpush1.msra.mxu0 %v69
    %1005 = vmatprep.subr.mxu0 %v72
    %1006 = vmatpush1.msra.mxu0 %v71
    %1007 = vmatprep.subr.mxu0 %v74
    %1008 = vmatpush1.msra.mxu0 %v73
    %1009 = vmatprep.subr.mxu0 %v76
    %1010 = vmatpush1.msra.mxu0 %v75
    %1011 = vmatprep.subr.mxu0 %v78
    %1012 = vmatpush1.msra.mxu0 %v77
    %1013 = vmatprep.subr.mxu0 %v80
    %1014 = vmatpush1.msra.mxu0 %v79
    %1015 = vmatprep.subr.mxu0 %v82
    %1016 = vmatpush1.msra.mxu0 %v81
    %1017 = vmatprep.subr.mxu0 %v84
    %1018 = vmatpush1.msra.mxu0 %v83
    %1019 = vmatprep.subr.mxu0 %v86
    %1020 = vmatpush1.msra.mxu0 %v85
    %1021 = vmatprep.subr.mxu0 %v88
    %1022 = vmatpush1.msra.mxu0 %v87
    %1023 = vmatprep.subr.mxu0 %v90
    %1024 = vmatpush1.msra.mxu0 %v89
    %1025 = vmatprep.subr.mxu0 %v92
    %1026 = vmatpush1.msra.mxu0 %v91
    %1027 = vmatprep.subr.mxu0 %v94
    %1028 = vmatpush1.msra.mxu0 %v93
    %1029 = vmatprep.subr.mxu0 %v96
    %1030 = vmatpush1.msra.mxu0 %v95
    %1031 = vmatprep.subr.mxu0 %v98
    %1032 = vmatpush1.msra.mxu0 %v97
    %1033 = vmatprep.subr.mxu0 0.0
    %1034 = vmatpush1.msra.mxu0 0.0
    %1035 = vmatprep.subr.mxu0 0.0
    %1036 = vmatpush1.msra.mxu0 0.0
    %1037 = vmatprep.subr.mxu0 0.0
    %1038 = vmatpush1.msra.mxu0 0.0
    %1039 = vmatprep.subr.mxu0 0.0
    %1040 = vmatpush1.msra.mxu0 0.0
    %1041 = vmatprep.subr.mxu0 0.0
    %1042 = vmatpush1.msra.mxu0 0.0
    %1043 = vmatprep.subr.mxu0 0.0
    %1044 = vmatpush1.msra.mxu0 0.0
    %1045 = vmatprep.subr.mxu0 0.0
    %1046 = vmatpush1.msra.mxu0 0.0
    %1047 = vmatprep.subr.mxu0 0.0
    %1048 = vmatpush1.msra.mxu0 0.0
    %1049 = vmatprep.subr.mxu0 0.0
    %1050 = vmatpush1.msra.mxu0 0.0
    %1051 = vmatprep.subr.mxu0 0.0
    %1052 = vmatpush1.msra.mxu0 0.0
    %1053 = vmatprep.subr.mxu0 0.0
    %1054 = vmatpush1.msra.mxu0 0.0
    %1055 = vmatprep.subr.mxu0 0.0
    %1056 = vmatpush1.msra.mxu0 0.0
    %1057 = vmatprep.subr.mxu0 0.0
    %1058 = vmatpush1.msra.mxu0 0.0
    %1059 = vmatprep.subr.mxu0 0.0
    %1060 = vmatpush1.msra.mxu0 0.0
    %1061 = vmatprep.mubr.f32.mxu0 %v995
    %1062 = vmatmul.mubr.f32.gmra.mrb[0].mxu0 %v992
    %v1063 = vpop.f32.mrb[0].mxu0
    %v1064 = vadd.f32 0.0, %v1063
    %v1065 = vpop.f32.mrb[0].mxu0
    %v1066 = vadd.f32 0.0, %v1065
    %1067 = vdwg.mxu0
    %v1068 = vmul.f32 %v1064, 0.0015432099
    %v1069 = vmul.f32 %v1066, 0.0015432099
    %v1070 = vadd.f32 %v1068, 1e-05
    %v1071 = vadd.f32 %v1069, 1e-05
    %v1072 = vrsqrt.pop %v1070
    %v1073 = vrsqrt.pop %v1071
    %v1074 = vlaneseq
    %v1075 = vshrl.u32 %v1074, 7
    %v1076 = vsub.s32 0, %v1075
    %v1077 = vrot.slane %v1072, %v1076
    %v1078 = vlaneseq
    %v1079 = vshrl.u32 %v1078, 7
    %v1080 = vsub.s32 0, %v1079
    %v1081 = vrot.slane %v1073, %v1080
    %v1082 = vmul.f32 %v926, %v1077
    %v1083 = vmul.f32 %v927, %v1081
    %v1084 = vmul.f32 %v928, %v1077
    %v1085 = vmul.f32 %v929, %v1081
    %v1086 = vmul.f32 %v930, %v1077
    %v1087 = vmul.f32 %v931, %v1081
    %v1089 = vlaneseq
    %v1090 = vshrl.u32 %v1089, 7
    %v1091 = vsub.s32 0, %v1090
    %v1092 = vrot.slane %v794, %v1091
    %v1093 = vlaneseq
    %v1094 = vshrl.u32 %v1093, 7
    %v1095 = vsub.s32 1, %v1094
    %v1096 = vrot.slane %v794, %v1095
    %v1099 = vmul.f32 %v1082, %v1092
    %v1100 = vmul.f32 %v1083, %v1096
    %v1101 = vmul.f32 %v1084, %v1092
    %v1102 = vmul.f32 %v1085, %v1096
    %v1103 = vmul.f32 %v1086, %v1092
    %v1104 = vmul.f32 %v1087, %v1096
    %v1106 = vlaneseq
    %v1107 = vshrl.u32 %v1106, 7
    %v1108 = vsub.s32 0, %v1107
    %v1109 = vrot.slane %v795, %v1108
    %v1110 = vlaneseq
    %v1111 = vshrl.u32 %v1110, 7
    %v1112 = vsub.s32 1, %v1111
    %v1113 = vrot.slane %v795, %v1112
    %v1116 = vadd.f32 %v1099, %v1109
    %v1117 = vadd.f32 %v1100, %v1113
    %v1118 = vadd.f32 %v1101, %v1109
    %v1119 = vadd.f32 %v1102, %v1113
    %v1120 = vadd.f32 %v1103, %v1109
    %v1121 = vadd.f32 %v1104, %v1113
    %v1122 = vmax.f32 %v1116, 0.0
    %v1123 = vmax.f32 %v1117, 0.0
    %v1124 = vmax.f32 %v1118, 0.0
    %v1125 = vmax.f32 %v1119, 0.0
    %v1126 = vmax.f32 %v1120, 0.0
    %v1127 = vmax.f32 %v1121, 0.0
    %v1128 = vmul.f32 %v960, %v1077
    %v1129 = vmul.f32 %v961, %v1081
    %v1130 = vmul.f32 %v962, %v1077
    %v1131 = vmul.f32 %v963, %v1081
    %v1132 = vmul.f32 %v964, %v1077
    %v1133 = vmul.f32 %v965, %v1081
    %v1134 = vmul.f32 %v1128, %v1092
    %v1135 = vmul.f32 %v1129, %v1096
    %v1136 = vmul.f32 %v1130, %v1092
    %v1137 = vmul.f32 %v1131, %v1096
    %v1138 = vmul.f32 %v1132, %v1092
    %v1139 = vmul.f32 %v1133, %v1096
    %v1140 = vadd.f32 %v1134, %v1109
    %v1141 = vadd.f32 %v1135, %v1113
    %v1142 = vadd.f32 %v1136, %v1109
    %v1143 = vadd.f32 %v1137, %v1113
    %v1144 = vadd.f32 %v1138, %v1109
    %v1145 = vadd.f32 %v1139, %v1113
    %v1146 = vmax.f32 %v1140, 0.0
    %v1147 = vmax.f32 %v1141, 0.0
    %v1148 = vmax.f32 %v1142, 0.0
    %v1149 = vmax.f32 %v1143, 0.0
    %v1150 = vmax.f32 %v1144, 0.0
    %v1151 = vmax.f32 %v1145, 0.0
    %vm1158 = vcmask 1040384
    %v1159 = vrot.slane %v1122, 7
    %v1160 = vrot.slane %v1123, 7
    %v1161 = vrot.slane %v1124, 7
    %v1162 = vsel %vm1158, %v1159, %v1161
    %v1163 = vrot.slane %v1125, 7
    %v1164 = vsel %vm1158, %v1160, %v1163
    %v1165 = vrot.slane %v1126, 7
    %v1166 = vsel %vm1158, %v1161, %v1165
    %v1167 = vrot.slane %v1127, 7
    %v1168 = vsel %vm1158, %v1163, %v1167
    %1175 = vst [vmem:[#allocation3] sm:$0xfe] %v1159
    %vm1176 = vcmask 130049
    %1177 = vst.msk [vmem:[#allocation3 + $0x8] sm:$0xfe] %vm1176, %v1160
    %1178 = vst [vmem:[#allocation3 + $0x10] sm:$0xff] %v1162
    %1179 = vst.msk [vmem:[#allocation3 + $0x18] sm:$0xff] %vm784, %v1164
    %1180 = vst [vmem:[#allocation3 + $0x20] sm:$0x7] %v1166
    %vm1181 = vcmask 124928
    %1182 = vst.msk [vmem:[#allocation3 + $0x28] sm:$0x7] %vm1181, %v1168
    %vm1189 = vcmask 1044480
    %v1190 = vrot.slane %v1146, 3
    %v1191 = vrot.slane %v1147, 3
    %v1192 = vrot.slane %v1148, 3
    %v1193 = vsel %vm1189, %v1190, %v1192
    %v1194 = vrot.slane %v1149, 3
    %v1195 = vsel %vm1189, %v1191, %v1194
    %v1196 = vrot.slane %v1150, 3
    %v1197 = vsel %vm1189, %v1192, %v1196
    %v1198 = vrot.slane %v1151, 3
    %v1199 = vsel %vm1189, %v1194, %v1198
    %1206 = vst [vmem:[#allocation3 + $0x20] sm:$0xe0] %v1190
    %vm1207 = vcmask 130053
    %1208 = vst.msk [vmem:[#allocation3 + $0x28] sm:$0xe0] %vm1207, %v1191
    %1209 = vst [vmem:[#allocation3 + $0x30] sm:$0xff] %v1193
    %1210 = vst.msk [vmem:[#allocation3 + $0x38] sm:$0xff] %vm784, %v1195
    %1211 = vst [vmem:[#allocation3 + $0x40] sm:$0x7f] %v1197
    %vm1212 = vcmask 129024
    %1213 = vst.msk [vmem:[#allocation3 + $0x48] sm:$0x7f] %vm1212, %v1199
    %v1214 = vld [vmem:[%s6] sm:$0x3]
    %v1216 = vlaneseq
    %v1217 = vshrl.u32 %v1216, 7
    %v1218 = vsub.s32 0, %v1217
    %v1219 = vrot.slane %v1214, %v1218
    %v1220 = vlaneseq
    %v1221 = vshrl.u32 %v1220, 7
    %v1222 = vsub.s32 1, %v1221
    %v1223 = vrot.slane %v1214, %v1222
    %v1226 = vadd.f32 %v1219, 0.0
    %v1227 = vadd.f32 %v1223, 0.0
    %v1228 = vld [vmem:[#allocation3] sm:$0xff]
    %v1229 = vld [vmem:[#allocation3 + $0x8] sm:$0xff]
    %v1230 = vld [vmem:[#allocation3 + $0x10] sm:$0xff]
    %v1231 = vld [vmem:[#allocation3 + $0x18] sm:$0xff]
    %v1232 = vld [vmem:[#allocation3 + $0x20] sm:$0x3]
    %v1233 = vld [vmem:[#allocation3 + $0x28] sm:$0x3]
    %v1234 = vld [vmem:[#allocation4] sm:$0xff]
    %v1235 = vld [vmem:[#allocation4 + $0x8] sm:$0xff]
    %v1236 = vld [vmem:[#allocation4 + $0x10] sm:$0xff]
    %v1237 = vld [vmem:[#allocation4 + $0x18] sm:$0xff]
    %v1238 = vld [vmem:[#allocation4 + $0x20] sm:$0xff]
    %v1239 = vld [vmem:[#allocation4 + $0x28] sm:$0xff]
    %v1240 = vld [vmem:[#allocation4 + $0x30] sm:$0xff]
    %v1241 = vld [vmem:[#allocation4 + $0x38] sm:$0xff]
    %v1242 = vld [vmem:[#allocation4 + $0x40] sm:$0xff]
    %v1243 = vld [vmem:[#allocation4 + $0x48] sm:$0xff]
    %v1244 = vld [vmem:[#allocation4 + $0x50] sm:$0xff]
    %v1245 = vld [vmem:[#allocation4 + $0x58] sm:$0xff]
    %v1246 = vld [vmem:[#allocation4 + $0x60] sm:$0xff]
    %v1247 = vld [vmem:[#allocation4 + $0x68] sm:$0xff]
    %v1248 = vld [vmem:[#allocation4 + $0x70] sm:$0xff]
    %v1249 = vld [vmem:[#allocation4 + $0x78] sm:$0xff]
    %v1250 = vld [vmem:[#allocation4 + $0x80] sm:$0xff]
    %v1251 = vld [vmem:[#allocation4 + $0x88] sm:$0xff]
    %v1252 = vld [vmem:[#allocation4 + $0x90] sm:$0xff]
    %v1253 = vld [vmem:[#allocation4 + $0x98] sm:$0xff]
    %v1254 = vld [vmem:[#allocation4 + $0xa0] sm:$0xff]
    %v1255 = vld [vmem:[#allocation4 + $0xa8] sm:$0xff]
    %v1256 = vld [vmem:[#allocation4 + $0xb0] sm:$0xff]
    %v1257 = vld [vmem:[#allocation4 + $0xb8] sm:$0xff]
    %v1258 = vld [vmem:[#allocation4 + $0xc0] sm:$0xff]
    %v1259 = vld [vmem:[#allocation4 + $0xc8] sm:$0xff]
    %v1260 = vld [vmem:[#allocation4 + $0xd0] sm:$0xff]
    %v1261 = vld [vmem:[#allocation4 + $0xd8] sm:$0xff]
    %v1262 = vld [vmem:[#allocation4 + $0xe0] sm:$0xff]
    %v1263 = vld [vmem:[#allocation4 + $0xe8] sm:$0xff]
    %v1264 = vld [vmem:[#allocation4 + $0xf0] sm:$0xff]
    %v1265 = vld [vmem:[#allocation4 + $0xf8] sm:$0xff]
    %v1266 = vld [vmem:[#allocation4 + $0x100] sm:$0xff]
    %v1267 = vld [vmem:[#allocation4 + $0x108] sm:$0xff]
    %v1268 = vld [vmem:[#allocation4 + $0x110] sm:$0xff]
    %v1269 = vld [vmem:[#allocation4 + $0x118] sm:$0xff]
    %v1271 = vsel %vm784, %v1229, 0
    %v1274 = vsel %vm784, %v1231, 0
    %v1277 = vsel %vm784, %v1233, 0
    %1279 = vmatprep.subr.mxu0 %v1235
    %1280 = vmatpush1.msra.mxu0 %v1234
    %1281 = vmatprep.subr.mxu0 %v1237
    %1282 = vmatpush1.msra.mxu0 %v1236
    %1283 = vmatprep.subr.mxu0 %v1239
    %1284 = vmatpush1.msra.mxu0 %v1238
    %1285 = vmatprep.subr.mxu0 %v1241
    %1286 = vmatpush1.msra.mxu0 %v1240
    %1287 = vmatprep.subr.mxu0 %v1243
    %1288 = vmatpush1.msra.mxu0 %v1242
    %1289 = vmatprep.subr.mxu0 %v1245
    %1290 = vmatpush1.msra.mxu0 %v1244
    %1291 = vmatprep.subr.mxu0 %v1247
    %1292 = vmatpush1.msra.mxu0 %v1246
    %1293 = vmatprep.subr.mxu0 %v1249
    %1294 = vmatpush1.msra.mxu0 %v1248
    %1295 = vmatprep.subr.mxu0 %v1251
    %1296 = vmatpush1.msra.mxu0 %v1250
    %1297 = vmatprep.subr.mxu0 %v1253
    %1298 = vmatpush1.msra.mxu0 %v1252
    %1299 = vmatprep.subr.mxu0 %v1255
    %1300 = vmatpush1.msra.mxu0 %v1254
    %1301 = vmatprep.subr.mxu0 %v1257
    %1302 = vmatpush1.msra.mxu0 %v1256
    %1303 = vmatprep.subr.mxu0 %v1259
    %1304 = vmatpush1.msra.mxu0 %v1258
    %1305 = vmatprep.subr.mxu0 %v1261
    %1306 = vmatpush1.msra.mxu0 %v1260
    %1307 = vmatprep.subr.mxu0 %v1263
    %1308 = vmatpush1.msra.mxu0 %v1262
    %1309 = vmatprep.subr.mxu0 %v1265
    %1310 = vmatpush1.msra.mxu0 %v1264
    %1311 = vmatprep.subr.mxu0 %v1267
    %1312 = vmatpush1.msra.mxu0 %v1266
    %1313 = vmatprep.subr.mxu0 %v1269
    %1314 = vmatpush1.msra.mxu0 %v1268
    %1315 = vmatprep.subr.mxu0 0.0
    %1316 = vmatpush1.msra.mxu0 0.0
    %1317 = vmatprep.subr.mxu0 0.0
    %1318 = vmatpush1.msra.mxu0 0.0
    %1319 = vmatprep.subr.mxu0 0.0
    %1320 = vmatpush1.msra.mxu0 0.0
    %1321 = vmatprep.subr.mxu0 0.0
    %1322 = vmatpush1.msra.mxu0 0.0
    %1323 = vmatprep.subr.mxu0 0.0
    %1324 = vmatpush1.msra.mxu0 0.0
    %1325 = vmatprep.subr.mxu0 0.0
    %1326 = vmatpush1.msra.mxu0 0.0
    %1327 = vmatprep.subr.mxu0 0.0
    %1328 = vmatpush1.msra.mxu0 0.0
    %1329 = vmatprep.subr.mxu0 0.0
    %1330 = vmatpush1.msra.mxu0 0.0
    %1331 = vmatprep.subr.mxu0 0.0
    %1332 = vmatpush1.msra.mxu0 0.0
    %1333 = vmatprep.subr.mxu0 0.0
    %1334 = vmatpush1.msra.mxu0 0.0
    %1335 = vmatprep.subr.mxu0 0.0
    %1336 = vmatpush1.msra.mxu0 0.0
    %1337 = vmatprep.subr.mxu0 0.0
    %1338 = vmatpush1.msra.mxu0 0.0
    %1339 = vmatprep.subr.mxu0 0.0
    %1340 = vmatpush1.msra.mxu0 0.0
    %1341 = vmatprep.subr.mxu0 0.0
    %1342 = vmatpush1.msra.mxu0 0.0
    %1343 = vmatprep.mubr.f32.mxu0 %v1271
    %1344 = vmatmul.mubr.f32.gmra.mrb[0].mxu0 %v1228
    %v1345 = vpop.f32.mrb[0].mxu0
    %v1346 = vadd.f32 0.0, %v1345
    %v1347 = vpop.f32.mrb[0].mxu0
    %v1348 = vadd.f32 0.0, %v1347
    %1349 = vmatprep.mubr.f32.mxu0 %v1274
    %1350 = vmatmul.mubr.f32.gmra.mrb[0].mxu0 %v1230
    %v1351 = vpop.f32.mrb[0].mxu0
    %v1352 = vadd.f32 0.0, %v1351
    %v1353 = vpop.f32.mrb[0].mxu0
    %v1354 = vadd.f32 0.0, %v1353
    %1355 = vmatprep.mubr.f32.mxu0 %v1277
    %1356 = vmatmul.mubr.f32.gmra.mrb[0].mxu0 %v1232
    %v1357 = vpop.f32.mrb[0].mxu0
    %v1358 = vadd.f32 0.0, %v1357
    %v1359 = vpop.f32.mrb[0].mxu0
    %v1360 = vadd.f32 0.0, %v1359
    %1361 = vdwg.mxu0
    %v1362 = vadd.f32 %v1226, %v1346
    %v1363 = vadd.f32 %v1227, %v1348
    %v1364 = vadd.f32 %v1226, %v1352
    %v1365 = vadd.f32 %v1227, %v1354
    %v1366 = vadd.f32 %v1226, %v1358
    %v1367 = vadd.f32 %v1227, %v1360
    %v1368 = vld [vmem:[#allocation3] sm:$0xfe]
    %v1369 = vld [vmem:[#allocation3 + $0x8] sm:$0xfe]
    %v1370 = vld [vmem:[#allocation3 + $0x20] sm:$0x7]
    %v1371 = vld [vmem:[#allocation3 + $0x28] sm:$0x7]
    %s1372 = scalar_lea.vmem [#allocation4], 288
    %v1373 = vld [vmem:[%s1372] sm:$0xff]
    %v1374 = vld [vmem:[%s1372 + $0x8] sm:$0xff]
    %v1375 = vld [vmem:[%s1372 + $0x10] sm:$0xff]
    %v1376 = vld [vmem:[%s1372 + $0x18] sm:$0xff]
    %v1377 = vld [vmem:[%s1372 + $0x20] sm:$0xff]
    %v1378 = vld [vmem:[%s1372 + $0x28] sm:$0xff]
    %v1379 = vld [vmem:[%s1372 + $0x30] sm:$0xff]
    %v1380 = vld [vmem:[%s1372 + $0x38] sm:$0xff]
    %v1381 = vld [vmem:[%s1372 + $0x40] sm:$0xff]
    %v1382 = vld [vmem:[%s1372 + $0x48] sm:$0xff]
    %v1383 = vld [vmem:[%s1372 + $0x50] sm:$0xff]
    %v1384 = vld [vmem:[%s1372 + $0x58] sm:$0xff]
    %v1385 = vld [vmem:[%s1372 + $0x60] sm:$0xff]
    %v1386 = vld [vmem:[%s1372 + $0x68] sm:$0xff]
    %v1387 = vld [vmem:[%s1372 + $0x70] sm:$0xff]
    %v1388 = vld [vmem:[%s1372 + $0x78] sm:$0xff]
    %v1389 = vld [vmem:[%s1372 + $0x80] sm:$0xff]
    %v1390 = vld [vmem:[%s1372 + $0x88] sm:$0xff]
    %v1391 = vld [vmem:[%s1372 + $0x90] sm:$0xff]
    %v1392 = vld [vmem:[%s1372 + $0x98] sm:$0xff]
    %v1393 = vld [vmem:[%s1372 + $0xa0] sm:$0xff]
    %v1394 = vld [vmem:[%s1372 + $0xa8] sm:$0xff]
    %v1395 = vld [vmem:[%s1372 + $0xb0] sm:$0xff]
    %v1396 = vld [vmem:[%s1372 + $0xb8] sm:$0xff]
    %v1397 = vld [vmem:[%s1372 + $0xc0] sm:$0xff]
    %v1398 = vld [vmem:[%s1372 + $0xc8] sm:$0xff]
    %v1399 = vld [vmem:[%s1372 + $0xd0] sm:$0xff]
    %v1400 = vld [vmem:[%s1372 + $0xd8] sm:$0xff]
    %v1401 = vld [vmem:[%s1372 + $0xe0] sm:$0xff]
    %v1402 = vld [vmem:[%s1372 + $0xe8] sm:$0xff]
    %v1403 = vld [vmem:[%s1372 + $0xf0] sm:$0xff]
    %v1404 = vld [vmem:[%s1372 + $0xf8] sm:$0xff]
    %v1405 = vld [vmem:[%s1372 + $0x100] sm:$0xff]
    %v1406 = vld [vmem:[%s1372 + $0x108] sm:$0xff]
    %v1407 = vld [vmem:[%s1372 + $0x110] sm:$0xff]
    %v1408 = vld [vmem:[%s1372 + $0x118] sm:$0xff]
    %vm1414 = vcmask 1046528
    %v1415 = vrot.slane %v1368, 1
    %v1416 = vrot.slane %v1230, 1
    %v1417 = vsel %vm1414, %v1415, %v1416
    %v1418 = vrot.slane %v1369, 1
    %v1419 = vrot.slane %v1231, 1
    %v1420 = vsel %vm1414, %v1418, %v1419
    %v1421 = vrot.slane %v1370, 1
    %v1422 = vsel %vm1414, %v1416, %v1421
    %v1423 = vrot.slane %v1371, 1
    %v1424 = vsel %vm1414, %v1419, %v1423
    %v1428 = vsel %vm784, %v1420, 0
    %v1430 = vsel %vm784, %v1424, 0
    %v1432 = vsel %vm784, %v1423, 0
    %1434 = vmatprep.subr.mxu0 %v1374
    %1435 = vmatpush1.msra.mxu0 %v1373
    %1436 = vmatprep.subr.mxu0 %v1376
    %1437 = vmatpush1.msra.mxu0 %v1375
    %1438 = vmatprep.subr.mxu0 %v1378
    %1439 = vmatpush1.msra.mxu0 %v1377
    %1440 = vmatprep.subr.mxu0 %v1380
    %1441 = vmatpush1.msra.mxu0 %v1379
    %1442 = vmatprep.subr.mxu0 %v1382
    %1443 = vmatpush1.msra.mxu0 %v1381
    %1444 = vmatprep.subr.mxu0 %v1384
    %1445 = vmatpush1.msra.mxu0 %v1383
    %1446 = vmatprep.subr.mxu0 %v1386
    %1447 = vmatpush1.msra.mxu0 %v1385
    %1448 = vmatprep.subr.mxu0 %v1388
    %1449 = vmatpush1.msra.mxu0 %v1387
    %1450 = vmatprep.subr.mxu0 %v1390
    %1451 = vmatpush1.msra.mxu0 %v1389
    %1452 = vmatprep.subr.mxu0 %v1392
    %1453 = vmatpush1.msra.mxu0 %v1391
    %1454 = vmatprep.subr.mxu0 %v1394
    %1455 = vmatpush1.msra.mxu0 %v1393
    %1456 = vmatprep.subr.mxu0 %v1396
    %1457 = vmatpush1.msra.mxu0 %v1395
    %1458 = vmatprep.subr.mxu0 %v1398
    %1459 = vmatpush1.msra.mxu0 %v1397
    %1460 = vmatprep.subr.mxu0 %v1400
    %1461 = vmatpush1.msra.mxu0 %v1399
    %1462 = vmatprep.subr.mxu0 %v1402
    %1463 = vmatpush1.msra.mxu0 %v1401
    %1464 = vmatprep.subr.mxu0 %v1404
    %1465 = vmatpush1.msra.mxu0 %v1403
    %1466 = vmatprep.subr.mxu0 %v1406
    %1467 = vmatpush1.msra.mxu0 %v1405
    %1468 = vmatprep.subr.mxu0 %v1408
    %1469 = vmatpush1.msra.mxu0 %v1407
    %1470 = vmatprep.subr.mxu0 0.0
    %1471 = vmatpush1.msra.mxu0 0.0
    %1472 = vmatprep.subr.mxu0 0.0
    %1473 = vmatpush1.msra.mxu0 0.0
    %1474 = vmatprep.subr.mxu0 0.0
    %1475 = vmatpush1.msra.mxu0 0.0
    %1476 = vmatprep.subr.mxu0 0.0
    %1477 = vmatpush1.msra.mxu0 0.0
    %1478 = vmatprep.subr.mxu0 0.0
    %1479 = vmatpush1.msra.mxu0 0.0
    %1480 = vmatprep.subr.mxu0 0.0
    %1481 = vmatpush1.msra.mxu0 0.0
    %1482 = vmatprep.subr.mxu0 0.0
    %1483 = vmatpush1.msra.mxu0 0.0
    %1484 = vmatprep.subr.mxu0 0.0
    %1485 = vmatpush1.msra.mxu0 0.0
    %1486 = vmatprep.subr.mxu0 0.0
    %1487 = vmatpush1.msra.mxu0 0.0
    %1488 = vmatprep.subr.mxu0 0.0
    %1489 = vmatpush1.msra.mxu0 0.0
    %1490 = vmatprep.subr.mxu0 0.0
    %1491 = vmatpush1.msra.mxu0 0.0
    %1492 = vmatprep.subr.mxu0 0.0
    %1493 = vmatpush1.msra.mxu0 0.0
    %1494 = vmatprep.subr.mxu0 0.0
    %1495 = vmatpush1.msra.mxu0 0.0
    %1496 = vmatprep.subr.mxu0 0.0
    %1497 = vmatpush1.msra.mxu0 0.0
    %1498 = vmatprep.mubr.f32.mxu0 %v1428
    %1499 = vmatmul.mubr.f32.gmra.mrb[0].mxu0 %v1417
    %v1500 = vpop.f32.mrb[0].mxu0
    %v1501 = vadd.f32 0.0, %v1500
    %v1502 = vpop.f32.mrb[0].mxu0
    %v1503 = vadd.f32 0.0, %v1502
    %1504 = vmatprep.mubr.f32.mxu0 %v1430
    %1505 = vmatmul.mubr.f32.gmra.mrb[0].mxu0 %v1422
    %v1506 = vpop.f32.mrb[0].mxu0
    %v1507 = vadd.f32 0.0, %v1506
    %v1508 = vpop.f32.mrb[0].mxu0
    %v1509 = vadd.f32 0.0, %v1508
    %1510 = vmatprep.mubr.f32.mxu0 %v1432
    %1511 = vmatmul.mubr.f32.gmra.mrb[0].mxu0 %v1421
    %v1512 = vpop.f32.mrb[0].mxu0
    %v1513 = vadd.f32 0.0, %v1512
    %v1514 = vpop.f32.mrb[0].mxu0
    %v1515 = vadd.f32 0.0, %v1514
    %1516 = vdwg.mxu0
    %v1517 = vadd.f32 %v1362, %v1501
    %v1518 = vadd.f32 %v1363, %v1503
    %v1519 = vadd.f32 %v1364, %v1507
    %v1520 = vadd.f32 %v1365, %v1509
    %v1521 = vadd.f32 %v1366, %v1513
    %v1522 = vadd.f32 %v1367, %v1515
    %v1523 = vld [vmem:[#allocation3] sm:$0xfc]
    %v1524 = vld [vmem:[#allocation3 + $0x8] sm:$0xfc]
    %v1525 = vld [vmem:[#allocation3 + $0x20] sm:$0xf]
    %v1526 = vld [vmem:[#allocation3 + $0x28] sm:$0xf]
    %s1527 = scalar_lea.vmem [#allocation4], 576
    %v1528 = vld [vmem:[%s1527] sm:$0xff]
    %v1529 = vld [vmem:[%s1527 + $0x8] sm:$0xff]
    %v1530 = vld [vmem:[%s1527 + $0x10] sm:$0xff]
    %v1531 = vld [vmem:[%s1527 + $0x18] sm:$0xff]
    %v1532 = vld [vmem:[%s1527 + $0x20] sm:$0xff]
    %v1533 = vld [vmem:[%s1527 + $0x28] sm:$0xff]
    %v1534 = vld [vmem:[%s1527 + $0x30] sm:$0xff]
    %v1535 = vld [vmem:[%s1527 + $0x38] sm:$0xff]
    %v1536 = vld [vmem:[%s1527 + $0x40] sm:$0xff]
    %v1537 = vld [vmem:[%s1527 + $0x48] sm:$0xff]
    %v1538 = vld [vmem:[%s1527 + $0x50] sm:$0xff]
    %v1539 = vld [vmem:[%s1527 + $0x58] sm:$0xff]
    %v1540 = vld [vmem:[%s1527 + $0x60] sm:$0xff]
    %v1541 = vld [vmem:[%s1527 + $0x68] sm:$0xff]
    %v1542 = vld [vmem:[%s1527 + $0x70] sm:$0xff]
    %v1543 = vld [vmem:[%s1527 + $0x78] sm:$0xff]
    %v1544 = vld [vmem:[%s1527 + $0x80] sm:$0xff]
    %v1545 = vld [vmem:[%s1527 + $0x88] sm:$0xff]
    %v1546 = vld [vmem:[%s1527 + $0x90] sm:$0xff]
    %v1547 = vld [vmem:[%s1527 + $0x98] sm:$0xff]
    %v1548 = vld [vmem:[%s1527 + $0xa0] sm:$0xff]
    %v1549 = vld [vmem:[%s1527 + $0xa8] sm:$0xff]
    %v1550 = vld [vmem:[%s1527 + $0xb0] sm:$0xff]
    %v1551 = vld [vmem:[%s1527 + $0xb8] sm:$0xff]
    %v1552 = vld [vmem:[%s1527 + $0xc0] sm:$0xff]
    %v1553 = vld [vmem:[%s1527 + $0xc8] sm:$0xff]
    %v1554 = vld [vmem:[%s1527 + $0xd0] sm:$0xff]
    %v1555 = vld [vmem:[%s1527 + $0xd8] sm:$0xff]
    %v1556 = vld [vmem:[%s1527 + $0xe0] sm:$0xff]
    %v1557 = vld [vmem:[%s1527 + $0xe8] sm:$0xff]
    %v1558 = vld [vmem:[%s1527 + $0xf0] sm:$0xff]
    %v1559 = vld [vmem:[%s1527 + $0xf8] sm:$0xff]
    %v1560 = vld [vmem:[%s1527 + $0x100] sm:$0xff]
    %v1561 = vld [vmem:[%s1527 + $0x108] sm:$0xff]
    %v1562 = vld [vmem:[%s1527 + $0x110] sm:$0xff]
    %v1563 = vld [vmem:[%s1527 + $0x118] sm:$0xff]
    %vm1568 = vcmask 1045504
    %v1569 = vrot.slane %v1523, 2
    %v1570 = vrot.slane %v1230, 2
    %v1571 = vsel %vm1568, %v1569, %v1570
    %v1572 = vrot.slane %v1524, 2
    %v1573 = vrot.slane %v1231, 2
    %v1574 = vsel %vm1568, %v1572, %v1573
    %v1575 = vrot.slane %v1525, 2
    %v1576 = vsel %vm1568, %v1570, %v1575
    %v1577 = vrot.slane %v1526, 2
    %v1578 = vsel %vm1568, %v1573, %v1577
    %v1582 = vsel %vm784, %v1574, 0
    %v1584 = vsel %vm784, %v1578, 0
    %v1586 = vsel %vm784, %v1577, 0
    %1588 = vmatprep.subr.mxu0 %v1529
    %1589 = vmatpush1.msra.mxu0 %v1528
    %1590 = vmatprep.subr.mxu0 %v1531
    %1591 = vmatpush1.msra.mxu0 %v1530
    %1592 = vmatprep.subr.mxu0 %v1533
    %1593 = vmatpush1.msra.mxu0 %v1532
    %1594 = vmatprep.subr.mxu0 %v1535
    %1595 = vmatpush1.msra.mxu0 %v1534
    %1596 = vmatprep.subr.mxu0 %v1537
    %1597 = vmatpush1.msra.mxu0 %v1536
    %1598 = vmatprep.subr.mxu0 %v1539
    %1599 = vmatpush1.msra.mxu0 %v1538
    %1600 = vmatprep.subr.mxu0 %v1541
    %1601 = vmatpush1.msra.mxu0 %v1540
    %1602 = vmatprep.subr.mxu0 %v1543
    %1603 = vmatpush1.msra.mxu0 %v1542
    %1604 = vmatprep.subr.mxu0 %v1545
    %1605 = vmatpush1.msra.mxu0 %v1544
    %1606 = vmatprep.subr.mxu0 %v1547
    %1607 = vmatpush1.msra.mxu0 %v1546
    %1608 = vmatprep.subr.mxu0 %v1549
    %1609 = vmatpush1.msra.mxu0 %v1548
    %1610 = vmatprep.subr.mxu0 %v1551
    %1611 = vmatpush1.msra.mxu0 %v1550
    %1612 = vmatprep.subr.mxu0 %v1553
    %1613 = vmatpush1.msra.mxu0 %v1552
    %1614 = vmatprep.subr.mxu0 %v1555
    %1615 = vmatpush1.msra.mxu0 %v1554
    %1616 = vmatprep.subr.mxu0 %v1557
    %1617 = vmatpush1.msra.mxu0 %v1556
    %1618 = vmatprep.subr.mxu0 %v1559
    %1619 = vmatpush1.msra.mxu0 %v1558
    %1620 = vmatprep.subr.mxu0 %v1561
    %1621 = vmatpush1.msra.mxu0 %v1560
    %1622 = vmatprep.subr.mxu0 %v1563
    %1623 = vmatpush1.msra.mxu0 %v1562
    %1624 = vmatprep.subr.mxu0 0.0
    %1625 = vmatpush1.msra.mxu0 0.0
    %1626 = vmatprep.subr.mxu0 0.0
    %1627 = vmatpush1.msra.mxu0 0.0
    %1628 = vmatprep.subr.mxu0 0.0
    %1629 = vmatpush1.msra.mxu0 0.0
    %1630 = vmatprep.subr.mxu0 0.0
    %1631 = vmatpush1.msra.mxu0 0.0
    %1632 = vmatprep.subr.mxu0 0.0
    %1633 = vmatpush1.msra.mxu0 0.0
    %1634 = vmatprep.subr.mxu0 0.0
    %1635 = vmatpush1.msra.mxu0 0.0
    %1636 = vmatprep.subr.mxu0 0.0
    %1637 = vmatpush1.msra.mxu0 0.0
    %1638 = vmatprep.subr.mxu0 0.0
    %1639 = vmatpush1.msra.mxu0 0.0
    %1640 = vmatprep.subr.mxu0 0.0
    %1641 = vmatpush1.msra.mxu0 0.0
    %1642 = vmatprep.subr.mxu0 0.0
    %1643 = vmatpush1.msra.mxu0 0.0
    %1644 = vmatprep.subr.mxu0 0.0
    %1645 = vmatpush1.msra.mxu0 0.0
    %1646 = vmatprep.subr.mxu0 0.0
    %1647 = vmatpush1.msra.mxu0 0.0
    %1648 = vmatprep.subr.mxu0 0.0
    %1649 = vmatpush1.msra.mxu0 0.0
    %1650 = vmatprep.subr.mxu0 0.0
    %1651 = vmatpush1.msra.mxu0 0.0
    %1652 = vmatprep.mubr.f32.mxu0 %v1582
    %1653 = vmatmul.mubr.f32.gmra.mrb[0].mxu0 %v1571
    %v1654 = vpop.f32.mrb[0].mxu0
    %v1655 = vadd.f32 0.0, %v1654
    %v1656 = vpop.f32.mrb[0].mxu0
    %v1657 = vadd.f32 0.0, %v1656
    %1658 = vmatprep.mubr.f32.mxu0 %v1584
    %1659 = vmatmul.mubr.f32.gmra.mrb[0].mxu0 %v1576
    %v1660 = vpop.f32.mrb[0].mxu0
    %v1661 = vadd.f32 0.0, %v1660
    %v1662 = vpop.f32.mrb[0].mxu0
    %v1663 = vadd.f32 0.0, %v1662
    %1664 = vmatprep.mubr.f32.mxu0 %v1586
    %1665 = vmatmul.mubr.f32.gmra.mrb[0].mxu0 %v1575
    %v1666 = vpop.f32.mrb[0].mxu0
    %v1667 = vadd.f32 0.0, %v1666
    %v1668 = vpop.f32.mrb[0].mxu0
    %v1669 = vadd.f32 0.0, %v1668
    %1670 = vdwg.mxu0
    %v1671 = vadd.f32 %v1517, %v1655
    %v1672 = vadd.f32 %v1518, %v1657
    %v1673 = vadd.f32 %v1519, %v1661
    %v1674 = vadd.f32 %v1520, %v1663
    %v1675 = vadd.f32 %v1521, %v1667
    %v1676 = vadd.f32 %v1522, %v1669
    %v1677 = vld [vmem:[#allocation3 + $0x20] sm:$0xf0]
    %v1678 = vld [vmem:[#allocation3 + $0x28] sm:$0xf0]
    %v1679 = vld [vmem:[#allocation3 + $0x30] sm:$0xff]
    %v1680 = vld [vmem:[#allocation3 + $0x38] sm:$0xff]
    %v1681 = vld [vmem:[#allocation3 + $0x40] sm:$0x3f]
    %v1682 = vld [vmem:[#allocation3 + $0x48] sm:$0x3f]
    %vm1689 = vcmask 1043456
    %v1690 = vrot.slane %v1677, 4
    %v1691 = vrot.slane %v1679, 4
    %v1692 = vsel %vm1689, %v1690, %v1691
    %v1693 = vrot.slane %v1678, 4
    %v1694 = vrot.slane %v1680, 4
    %v1695 = vsel %vm1689, %v1693, %v1694
    %v1696 = vrot.slane %v1681, 4
    %v1697 = vsel %vm1689, %v1691, %v1696
    %v1698 = vrot.slane %v1682, 4
    %v1699 = vsel %vm1689, %v1694, %v1698
    %v1703 = vsel %vm784, %v1695, 0
    %v1705 = vsel %vm784, %v1699, 0
    %v1707 = vsel %vm784, %v1698, 0
    %1709 = vmatprep.subr.mxu0 %v1235
    %1710 = vmatpush1.msra.mxu0 %v1234
    %1711 = vmatprep.subr.mxu0 %v1237
    %1712 = vmatpush1.msra.mxu0 %v1236
    %1713 = vmatprep.subr.mxu0 %v1239
    %1714 = vmatpush1.msra.mxu0 %v1238
    %1715 = vmatprep.subr.mxu0 %v1241
    %1716 = vmatpush1.msra.mxu0 %v1240
    %1717 = vmatprep.subr.mxu0 %v1243
    %1718 = vmatpush1.msra.mxu0 %v1242
    %1719 = vmatprep.subr.mxu0 %v1245
    %1720 = vmatpush1.msra.mxu0 %v1244
    %1721 = vmatprep.subr.mxu0 %v1247
    %1722 = vmatpush1.msra.mxu0 %v1246
    %1723 = vmatprep.subr.mxu0 %v1249
    %1724 = vmatpush1.msra.mxu0 %v1248
    %1725 = vmatprep.subr.mxu0 %v1251
    %1726 = vmatpush1.msra.mxu0 %v1250
    %1727 = vmatprep.subr.mxu0 %v1253
    %1728 = vmatpush1.msra.mxu0 %v1252
    %1729 = vmatprep.subr.mxu0 %v1255
    %1730 = vmatpush1.msra.mxu0 %v1254
    %1731 = vmatprep.subr.mxu0 %v1257
    %1732 = vmatpush1.msra.mxu0 %v1256
    %1733 = vmatprep.subr.mxu0 %v1259
    %1734 = vmatpush1.msra.mxu0 %v1258
    %1735 = vmatprep.subr.mxu0 %v1261
    %1736 = vmatpush1.msra.mxu0 %v1260
    %1737 = vmatprep.subr.mxu0 %v1263
    %1738 = vmatpush1.msra.mxu0 %v1262
    %1739 = vmatprep.subr.mxu0 %v1265
    %1740 = vmatpush1.msra.mxu0 %v1264
    %1741 = vmatprep.subr.mxu0 %v1267
    %1742 = vmatpush1.msra.mxu0 %v1266
    %1743 = vmatprep.subr.mxu0 %v1269
    %1744 = vmatpush1.msra.mxu0 %v1268
    %1745 = vmatprep.subr.mxu0 0.0
    %1746 = vmatpush1.msra.mxu0 0.0
    %1747 = vmatprep.subr.mxu0 0.0
    %1748 = vmatpush1.msra.mxu0 0.0
    %1749 = vmatprep.subr.mxu0 0.0
    %1750 = vmatpush1.msra.mxu0 0.0
    %1751 = vmatprep.subr.mxu0 0.0
    %1752 = vmatpush1.msra.mxu0 0.0
    %1753 = vmatprep.subr.mxu0 0.0
    %1754 = vmatpush1.msra.mxu0 0.0
    %1755 = vmatprep.subr.mxu0 0.0
    %1756 = vmatpush1.msra.mxu0 0.0
    %1757 = vmatprep.subr.mxu0 0.0
    %1758 = vmatpush1.msra.mxu0 0.0
    %1759 = vmatprep.subr.mxu0 0.0
    %1760 = vmatpush1.msra.mxu0 0.0
    %1761 = vmatprep.subr.mxu0 0.0
    %1762 = vmatpush1.msra.mxu0 0.0
    %1763 = vmatprep.subr.mxu0 0.0
    %1764 = vmatpush1.msra.mxu0 0.0
    %1765 = vmatprep.subr.mxu0 0.0
    %1766 = vmatpush1.msra.mxu0 0.0
    %1767 = vmatprep.subr.mxu0 0.0
    %1768 = vmatpush1.msra.mxu0 0.0
    %1769 = vmatprep.subr.mxu0 0.0
    %1770 = vmatpush1.msra.mxu0 0.0
    %1771 = vmatprep.subr.mxu0 0.0
    %1772 = vmatpush1.msra.mxu0 0.0
    %1773 = vmatprep.mubr.f32.mxu0 %v1703
    %1774 = vmatmul.mubr.f32.gmra.mrb[0].mxu0 %v1692
    %v1775 = vpop.f32.mrb[0].mxu0
    %v1776 = vadd.f32 0.0, %v1775
    %v1777 = vpop.f32.mrb[0].mxu0
    %v1778 = vadd.f32 0.0, %v1777
    %1779 = vmatprep.mubr.f32.mxu0 %v1705
    %1780 = vmatmul.mubr.f32.gmra.mrb[0].mxu0 %v1697
    %v1781 = vpop.f32.mrb[0].mxu0
    %v1782 = vadd.f32 0.0, %v1781
    %v1783 = vpop.f32.mrb[0].mxu0
    %v1784 = vadd.f32 0.0, %v1783
    %1785 = vmatprep.mubr.f32.mxu0 %v1707
    %1786 = vmatmul.mubr.f32.gmra.mrb[0].mxu0 %v1696
    %v1787 = vpop.f32.mrb[0].mxu0
    %v1788 = vadd.f32 0.0, %v1787
    %v1789 = vpop.f32.mrb[0].mxu0
    %v1790 = vadd.f32 0.0, %v1789
    %1791 = vdwg.mxu0
    %v1792 = vadd.f32 %v1226, %v1776
    %v1793 = vadd.f32 %v1227, %v1778
    %v1794 = vadd.f32 %v1226, %v1782
    %v1795 = vadd.f32 %v1227, %v1784
    %v1796 = vadd.f32 %v1226, %v1788
    %v1797 = vadd.f32 %v1227, %v1790
    %v1798 = vld [vmem:[#allocation3 + $0x20] sm:$0xe0]
    %v1799 = vld [vmem:[#allocation3 + $0x28] sm:$0xe0]
    %v1800 = vld [vmem:[#allocation3 + $0x40] sm:$0x7f]
    %v1801 = vld [vmem:[#allocation3 + $0x48] sm:$0x7f]
    %vm1806 = vcmask 1042432
    %v1807 = vrot.slane %v1798, 5
    %v1808 = vrot.slane %v1679, 5
    %v1809 = vsel %vm1806, %v1807, %v1808
    %v1810 = vrot.slane %v1799, 5
    %v1811 = vrot.slane %v1680, 5
    %v1812 = vsel %vm1806, %v1810, %v1811
    %v1813 = vrot.slane %v1800, 5
    %v1814 = vsel %vm1806, %v1808, %v1813
    %v1815 = vrot.slane %v1801, 5
    %v1816 = vsel %vm1806, %v1811, %v1815
    %v1820 = vsel %vm784, %v1812, 0
    %v1822 = vsel %vm784, %v1816, 0
    %v1824 = vsel %vm784, %v1815, 0
    %1826 = vmatprep.subr.mxu0 %v1374
    %1827 = vmatpush1.msra.mxu0 %v1373
    %1828 = vmatprep.subr.mxu0 %v1376
    %1829 = vmatpush1.msra.mxu0 %v1375
    %1830 = vmatprep.subr.mxu0 %v1378
    %1831 = vmatpush1.msra.mxu0 %v1377
    %1832 = vmatprep.subr.mxu0 %v1380
    %1833 = vmatpush1.msra.mxu0 %v1379
    %1834 = vmatprep.subr.mxu0 %v1382
    %1835 = vmatpush1.msra.mxu0 %v1381
    %1836 = vmatprep.subr.mxu0 %v1384
    %1837 = vmatpush1.msra.mxu0 %v1383
    %1838 = vmatprep.subr.mxu0 %v1386
    %1839 = vmatpush1.msra.mxu0 %v1385
    %1840 = vmatprep.subr.mxu0 %v1388
    %1841 = vmatpush1.msra.mxu0 %v1387
    %1842 = vmatprep.subr.mxu0 %v1390
    %1843 = vmatpush1.msra.mxu0 %v1389
    %1844 = vmatprep.subr.mxu0 %v1392
    %1845 = vmatpush1.msra.mxu0 %v1391
    %1846 = vmatprep.subr.mxu0 %v1394
    %1847 = vmatpush1.msra.mxu0 %v1393
    %1848 = vmatprep.subr.mxu0 %v1396
    %1849 = vmatpush1.msra.mxu0 %v1395
    %1850 = vmatprep.subr.mxu0 %v1398
    %1851 = vmatpush1.msra.mxu0 %v1397
    %1852 = vmatprep.subr.mxu0 %v1400
    %1853 = vmatpush1.msra.mxu0 %v1399
    %1854 = vmatprep.subr.mxu0 %v1402
    %1855 = vmatpush1.msra.mxu0 %v1401
    %1856 = vmatprep.subr.mxu0 %v1404
    %1857 = vmatpush1.msra.mxu0 %v1403
    %1858 = vmatprep.subr.mxu0 %v1406
    %1859 = vmatpush1.msra.mxu0 %v1405
    %1860 = vmatprep.subr.mxu0 %v1408
    %1861 = vmatpush1.msra.mxu0 %v1407
    %1862 = vmatprep.subr.mxu0 0.0
    %1863 = vmatpush1.msra.mxu0 0.0
    %1864 = vmatprep.subr.mxu0 0.0
    %1865 = vmatpush1.msra.mxu0 0.0
    %1866 = vmatprep.subr.mxu0 0.0
    %1867 = vmatpush1.msra.mxu0 0.0
    %1868 = vmatprep.subr.mxu0 0.0
    %1869 = vmatpush1.msra.mxu0 0.0
    %1870 = vmatprep.subr.mxu0 0.0
    %1871 = vmatpush1.msra.mxu0 0.0
    %1872 = vmatprep.subr.mxu0 0.0
    %1873 = vmatpush1.msra.mxu0 0.0
    %1874 = vmatprep.subr.mxu0 0.0
    %1875 = vmatpush1.msra.mxu0 0.0
    %1876 = vmatprep.subr.mxu0 0.0
    %1877 = vmatpush1.msra.mxu0 0.0
    %1878 = vmatprep.subr.mxu0 0.0
    %1879 = vmatpush1.msra.mxu0 0.0
    %1880 = vmatprep.subr.mxu0 0.0
    %1881 = vmatpush1.msra.mxu0 0.0
    %1882 = vmatprep.subr.mxu0 0.0
    %1883 = vmatpush1.msra.mxu0 0.0
    %1884 = vmatprep.subr.mxu0 0.0
    %1885 = vmatpush1.msra.mxu0 0.0
    %1886 = vmatprep.subr.mxu0 0.0
    %1887 = vmatpush1.msra.mxu0 0.0
    %1888 = vmatprep.subr.mxu0 0.0
    %1889 = vmatpush1.msra.mxu0 0.0
    %1890 = vmatprep.mubr.f32.mxu0 %v1820
    %1891 = vmatmul.mubr.f32.gmra.mrb[0].mxu0 %v1809
    %v1892 = vpop.f32.mrb[0].mxu0
    %v1893 = vadd.f32 0.0, %v1892
    %v1894 = vpop.f32.mrb[0].mxu0
    %v1895 = vadd.f32 0.0, %v1894
    %1896 = vmatprep.mubr.f32.mxu0 %v1822
    %1897 = vmatmul.mubr.f32.gmra.mrb[0].mxu0 %v1814
    %v1898 = vpop.f32.mrb[0].mxu0
    %v1899 = vadd.f32 0.0, %v1898
    %v1900 = vpop.f32.mrb[0].mxu0
    %v1901 = vadd.f32 0.0, %v1900
    %1902 = vmatprep.mubr.f32.mxu0 %v1824
    %1903 = vmatmul.mubr.f32.gmra.mrb[0].mxu0 %v1813
    %v1904 = vpop.f32.mrb[0].mxu0
    %v1905 = vadd.f32 0.0, %v1904
    %v1906 = vpop.f32.mrb[0].mxu0
    %v1907 = vadd.f32 0.0, %v1906
    %1908 = vdwg.mxu0
    %v1909 = vadd.f32 %v1792, %v1893
    %v1910 = vadd.f32 %v1793, %v1895
    %v1911 = vadd.f32 %v1794, %v1899
    %v1912 = vadd.f32 %v1795, %v1901
    %v1913 = vadd.f32 %v1796, %v1905
    %v1914 = vadd.f32 %v1797, %v1907
    %v1915 = vld [vmem:[#allocation3 + $0x20] sm:$0xc0]
    %v1916 = vld [vmem:[#allocation3 + $0x28] sm:$0xc0]
    %v1917 = vld [vmem:[#allocation3 + $0x40] sm:$0xff]
    %v1918 = vld [vmem:[#allocation3 + $0x48] sm:$0xff]
    %v1923 = vrot.slane %v1915, 6
    %v1924 = vrot.slane %v1679, 6
    %v1925 = vsel %vm797, %v1923, %v1924
    %v1926 = vrot.slane %v1916, 6
    %v1927 = vrot.slane %v1680, 6
    %v1928 = vsel %vm797, %v1926, %v1927
    %v1929 = vrot.slane %v1917, 6
    %v1930 = vsel %vm797, %v1924, %v1929
    %v1931 = vrot.slane %v1918, 6
    %v1932 = vsel %vm797, %v1927, %v1931
    %v1936 = vsel %vm784, %v1928, 0
    %v1938 = vsel %vm784, %v1932, 0
    %v1940 = vsel %vm784, %v1931, 0
    %1942 = vmatprep.subr.mxu0 %v1529
    %1943 = vmatpush1.msra.mxu0 %v1528
    %1944 = vmatprep.subr.mxu0 %v1531
    %1945 = vmatpush1.msra.mxu0 %v1530
    %1946 = vmatprep.subr.mxu0 %v1533
    %1947 = vmatpush1.msra.mxu0 %v1532
    %1948 = vmatprep.subr.mxu0 %v1535
    %1949 = vmatpush1.msra.mxu0 %v1534
    %1950 = vmatprep.subr.mxu0 %v1537
    %1951 = vmatpush1.msra.mxu0 %v1536
    %1952 = vmatprep.subr.mxu0 %v1539
    %1953 = vmatpush1.msra.mxu0 %v1538
    %1954 = vmatprep.subr.mxu0 %v1541
    %1955 = vmatpush1.msra.mxu0 %v1540
    %1956 = vmatprep.subr.mxu0 %v1543
    %1957 = vmatpush1.msra.mxu0 %v1542
    %1958 = vmatprep.subr.mxu0 %v1545
    %1959 = vmatpush1.msra.mxu0 %v1544
    %1960 = vmatprep.subr.mxu0 %v1547
    %1961 = vmatpush1.msra.mxu0 %v1546
    %1962 = vmatprep.subr.mxu0 %v1549
    %1963 = vmatpush1.msra.mxu0 %v1548
    %1964 = vmatprep.subr.mxu0 %v1551
    %1965 = vmatpush1.msra.mxu0 %v1550
    %1966 = vmatprep.subr.mxu0 %v1553
    %1967 = vmatpush1.msra.mxu0 %v1552
    %1968 = vmatprep.subr.mxu0 %v1555
    %1969 = vmatpush1.msra.mxu0 %v1554
    %1970 = vmatprep.subr.mxu0 %v1557
    %1971 = vmatpush1.msra.mxu0 %v1556
    %1972 = vmatprep.subr.mxu0 %v1559
    %1973 = vmatpush1.msra.mxu0 %v1558
    %1974 = vmatprep.subr.mxu0 %v1561
    %1975 = vmatpush1.msra.mxu0 %v1560
    %1976 = vmatprep.subr.mxu0 %v1563
    %1977 = vmatpush1.msra.mxu0 %v1562
    %1978 = vmatprep.subr.mxu0 0.0
    %1979 = vmatpush1.msra.mxu0 0.0
    %1980 = vmatprep.subr.mxu0 0.0
    %1981 = vmatpush1.msra.mxu0 0.0
    %1982 = vmatprep.subr.mxu0 0.0
    %1983 = vmatpush1.msra.mxu0 0.0
    %1984 = vmatprep.subr.mxu0 0.0
    %1985 = vmatpush1.msra.mxu0 0.0
    %1986 = vmatprep.subr.mxu0 0.0
    %1987 = vmatpush1.msra.mxu0 0.0
    %1988 = vmatprep.subr.mxu0 0.0
    %1989 = vmatpush1.msra.mxu0 0.0
    %1990 = vmatprep.subr.mxu0 0.0
    %1991 = vmatpush1.msra.mxu0 0.0
    %1992 = vmatprep.subr.mxu0 0.0
    %1993 = vmatpush1.msra.mxu0 0.0
    %1994 = vmatprep.subr.mxu0 0.0
    %1995 = vmatpush1.msra.mxu0 0.0
    %1996 = vmatprep.subr.mxu0 0.0
    %1997 = vmatpush1.msra.mxu0 0.0
    %1998 = vmatprep.subr.mxu0 0.0
    %1999 = vmatpush1.msra.mxu0 0.0
    %2000 = vmatprep.subr.mxu0 0.0
    %2001 = vmatpush1.msra.mxu0 0.0
    %2002 = vmatprep.subr.mxu0 0.0
    %2003 = vmatpush1.msra.mxu0 0.0
    %2004 = vmatprep.subr.mxu0 0.0
    %2005 = vmatpush1.msra.mxu0 0.0
    %2006 = vmatprep.mubr.f32.mxu0 %v1936
    %2007 = vmatmul.mubr.f32.gmra.mrb[0].mxu0 %v1925
    %v2008 = vpop.f32.mrb[0].mxu0
    %v2009 = vadd.f32 0.0, %v2008
    %v2010 = vpop.f32.mrb[0].mxu0
    %v2011 = vadd.f32 0.0, %v2010
    %2012 = vmatprep.mubr.f32.mxu0 %v1938
    %2013 = vmatmul.mubr.f32.gmra.mrb[0].mxu0 %v1930
    %v2014 = vpop.f32.mrb[0].mxu0
    %v2015 = vadd.f32 0.0, %v2014
    %v2016 = vpop.f32.mrb[0].mxu0
    %v2017 = vadd.f32 0.0, %v2016
    %2018 = vmatprep.mubr.f32.mxu0 %v1940
    %2019 = vmatmul.mubr.f32.gmra.mrb[0].mxu0 %v1929
    %v2020 = vpop.f32.mrb[0].mxu0
    %v2021 = vadd.f32 0.0, %v2020
    %v2022 = vpop.f32.mrb[0].mxu0
    %v2023 = vadd.f32 0.0, %v2022
    %2024 = vdwg.mxu0
    %v2025 = vadd.f32 %v1909, %v2009
    %v2026 = vadd.f32 %v1910, %v2011
    %v2027 = vadd.f32 %v1911, %v2015
    %v2028 = vadd.f32 %v1912, %v2017
    %v2029 = vadd.f32 %v1913, %v2021
    %v2030 = vadd.f32 %v1914, %v2023
    %v2031 = vld [vmem:[%s7] sm:$0x3]
    %v2032 = vld [vmem:[%s8] sm:$0x3]
    %v2033 = vadd.f32 %v1671, %v1673
    %v2034 = vsel %vm797, %v1675, 0.0
    %v2035 = vadd.f32 %v2033, %v2034
    %v2036 = vrot.slane %v2035, 4
    %v2037 = vadd.f32 %v2035, %v2036
    %v2038 = vrot.slane %v2037, 2
    %v2039 = vadd.f32 %v2037, %v2038
    %v2040 = vrot.slane %v2039, 1
    %v2041 = vadd.f32 %v2039, %v2040
    %v2042 = vsel %vm784, %v1672, 0.0
    %v2043 = vsel %vm784, %v1674, 0.0
    %v2044 = vadd.f32 %v2042, %v2043
    %v2045 = vsel %vm809, %v1676, 0.0
    %v2046 = vadd.f32 %v2044, %v2045
    %v2047 = vrot.slane %v2046, 4
    %v2048 = vadd.f32 %v2046, %v2047
    %v2049 = vrot.slane %v2048, 2
    %v2050 = vadd.f32 %v2048, %v2049
    %v2051 = vrot.slane %v2050, 1
    %v2052 = vadd.f32 %v2050, %v2051
    %v2053 = vadd.f32 %v2041, 0.0
    %v2054 = vadd.f32 %v2052, 0.0
    %v2055 = vadd.f32 %v2025, %v2027
    %v2056 = vsel %vm797, %v2029, 0.0
    %v2057 = vadd.f32 %v2055, %v2056
    %v2058 = vrot.slane %v2057, 4
    %v2059 = vadd.f32 %v2057, %v2058
    %v2060 = vrot.slane %v2059, 2
    %v2061 = vadd.f32 %v2059, %v2060
    %v2062 = vrot.slane %v2061, 1
    %v2063 = vadd.f32 %v2061, %v2062
    %v2064 = vsel %vm784, %v2026, 0.0
    %v2065 = vsel %vm784, %v2028, 0.0
    %v2066 = vadd.f32 %v2064, %v2065
    %v2067 = vsel %vm809, %v2030, 0.0
    %v2068 = vadd.f32 %v2066, %v2067
    %v2069 = vrot.slane %v2068, 4
    %v2070 = vadd.f32 %v2068, %v2069
    %v2071 = vrot.slane %v2070, 2
    %v2072 = vadd.f32 %v2070, %v2071
    %v2073 = vrot.slane %v2072, 1
    %v2074 = vadd.f32 %v2072, %v2073
    %v2075 = vadd.f32 %v2053, %v2063
    %v2076 = vadd.f32 %v2054, %v2074
    %v2078 = vsel %vm784, %v2076, 0
    %2080 = vmatprep.subr.mxu0 %v64
    %2081 = vmatpush1.msra.mxu0 %v63
    %2082 = vmatprep.subr.mxu0 %v66
    %2083 = vmatpush1.msra.mxu0 %v65
    %2084 = vmatprep.subr.mxu0 %v68
    %2085 = vmatpush1.msra.mxu0 %v67
    %2086 = vmatprep.subr.mxu0 %v70
    %2087 = vmatpush1.msra.mxu0 %v69
    %2088 = vmatprep.subr.mxu0 %v72
    %2089 = vmatpush1.msra.mxu0 %v71
    %2090 = vmatprep.subr.mxu0 %v74
    %2091 = vmatpush1.msra.mxu0 %v73
    %2092 = vmatprep.subr.mxu0 %v76
    %2093 = vmatpush1.msra.mxu0 %v75
    %2094 = vmatprep.subr.mxu0 %v78
    %2095 = vmatpush1.msra.mxu0 %v77
    %2096 = vmatprep.subr.mxu0 %v80
    %2097 = vmatpush1.msra.mxu0 %v79
    %2098 = vmatprep.subr.mxu0 %v82
    %2099 = vmatpush1.msra.mxu0 %v81
    %2100 = vmatprep.subr.mxu0 %v84
    %2101 = vmatpush1.msra.mxu0 %v83
    %2102 = vmatprep.subr.mxu0 %v86
    %2103 = vmatpush1.msra.mxu0 %v85
    %2104 = vmatprep.subr.mxu0 %v88
    %2105 = vmatpush1.msra.mxu0 %v87
    %2106 = vmatprep.subr.mxu0 %v90
    %2107 = vmatpush1.msra.mxu0 %v89
    %2108 = vmatprep.subr.mxu0 %v92
    %2109 = vmatpush1.msra.mxu0 %v91
    %2110 = vmatprep.subr.mxu0 %v94
    %2111 = vmatpush1.msra.mxu0 %v93
    %2112 = vmatprep.subr.mxu0 %v96
    %2113 = vmatpush1.msra.mxu0 %v95
    %2114 = vmatprep.subr.mxu0 %v98
    %2115 = vmatpush1.msra.mxu0 %v97
    %2116 = vmatprep.subr.mxu0 0.0
    %2117 = vmatpush1.msra.mxu0 0.0
    %2118 = vmatprep.subr.mxu0 0.0
    %2119 = vmatpush1.msra.mxu0 0.0
    %2120 = vmatprep.subr.mxu0 0.0
    %2121 = vmatpush1.msra.mxu0 0.0
    %2122 = vmatprep.subr.mxu0 0.0
    %2123 = vmatpush1.msra.mxu0 0.0
    %2124 = vmatprep.subr.mxu0 0.0
    %2125 = vmatpush1.msra.mxu0 0.0
    %2126 = vmatprep.subr.mxu0 0.0
    %2127 = vmatpush1.msra.mxu0 0.0
    %2128 = vmatprep.subr.mxu0 0.0
    %2129 = vmatpush1.msra.mxu0 0.0
    %2130 = vmatprep.subr.mxu0 0.0
    %2131 = vmatpush1.msra.mxu0 0.0
    %2132 = vmatprep.subr.mxu0 0.0
    %2133 = vmatpush1.msra.mxu0 0.0
    %2134 = vmatprep.subr.mxu0 0.0
    %2135 = vmatpush1.msra.mxu0 0.0
    %2136 = vmatprep.subr.mxu0 0.0
    %2137 = vmatpush1.msra.mxu0 0.0
    %2138 = vmatprep.subr.mxu0 0.0
    %2139 = vmatpush1.msra.mxu0 0.0
    %2140 = vmatprep.subr.mxu0 0.0
    %2141 = vmatpush1.msra.mxu0 0.0
    %2142 = vmatprep.subr.mxu0 0.0
    %2143 = vmatpush1.msra.mxu0 0.0
    %2144 = vmatprep.mubr.f32.mxu0 %v2078
    %2145 = vmatmul.mubr.f32.gmra.mrb[0].mxu0 %v2075
    %v2146 = vpop.f32.mrb[0].mxu0
    %v2147 = vadd.f32 0.0, %v2146
    %v2148 = vpop.f32.mrb[0].mxu0
    %v2149 = vadd.f32 0.0, %v2148
    %2150 = vdwg.mxu0
    %v2151 = vmul.f32 %v2147, 0.0015432099
    %v2152 = vmul.f32 %v2149, 0.0015432099
    %v2153 = vlaneseq
    %v2154 = vshrl.u32 %v2153, 7
    %v2155 = vsub.s32 0, %v2154
    %v2156 = vrot.slane %v2151, %v2155
    %v2157 = vlaneseq
    %v2158 = vshrl.u32 %v2157, 7
    %v2159 = vsub.s32 0, %v2158
    %v2160 = vrot.slane %v2152, %v2159
    %v2161 = vsub.f32 %v1671, %v2156
    %v2162 = vsub.f32 %v1672, %v2160
    %v2163 = vsub.f32 %v1673, %v2156
    %v2164 = vsub.f32 %v1674, %v2160
    %v2165 = vsub.f32 %v1675, %v2156
    %v2166 = vsub.f32 %v1676, %v2160
    %v2167 = vmul.f32 %v2161, %v2161
    %v2168 = vmul.f32 %v2162, %v2162
    %v2169 = vmul.f32 %v2163, %v2163
    %v2170 = vmul.f32 %v2164, %v2164
    %v2171 = vmul.f32 %v2165, %v2165
    %v2172 = vmul.f32 %v2166, %v2166
    %v2173 = vadd.f32 %v2167, %v2169
    %v2174 = vsel %vm797, %v2171, 0.0
    %v2175 = vadd.f32 %v2173, %v2174
    %v2176 = vrot.slane %v2175, 4
    %v2177 = vadd.f32 %v2175, %v2176
    %v2178 = vrot.slane %v2177, 2
    %v2179 = vadd.f32 %v2177, %v2178
    %v2180 = vrot.slane %v2179, 1
    %v2181 = vadd.f32 %v2179, %v2180
    %v2182 = vsel %vm784, %v2168, 0.0
    %v2183 = vsel %vm784, %v2170, 0.0
    %v2184 = vadd.f32 %v2182, %v2183
    %v2185 = vsel %vm809, %v2172, 0.0
    %v2186 = vadd.f32 %v2184, %v2185
    %v2187 = vrot.slane %v2186, 4
    %v2188 = vadd.f32 %v2186, %v2187
    %v2189 = vrot.slane %v2188, 2
    %v2190 = vadd.f32 %v2188, %v2189
    %v2191 = vrot.slane %v2190, 1
    %v2192 = vadd.f32 %v2190, %v2191
    %v2193 = vadd.f32 %v2181, 0.0
    %v2194 = vadd.f32 %v2192, 0.0
    %v2195 = vsub.f32 %v2025, %v2156
    %v2196 = vsub.f32 %v2026, %v2160
    %v2197 = vsub.f32 %v2027, %v2156
    %v2198 = vsub.f32 %v2028, %v2160
    %v2199 = vsub.f32 %v2029, %v2156
    %v2200 = vsub.f32 %v2030, %v2160
    %v2201 = vmul.f32 %v2195, %v2195
    %v2202 = vmul.f32 %v2196, %v2196
    %v2203 = vmul.f32 %v2197, %v2197
    %v2204 = vmul.f32 %v2198, %v2198
    %v2205 = vmul.f32 %v2199, %v2199
    %v2206 = vmul.f32 %v2200, %v2200
    %v2207 = vadd.f32 %v2201, %v2203
    %v2208 = vsel %vm797, %v2205, 0.0
    %v2209 = vadd.f32 %v2207, %v2208
    %v2210 = vrot.slane %v2209, 4
    %v2211 = vadd.f32 %v2209, %v2210
    %v2212 = vrot.slane %v2211, 2
    %v2213 = vadd.f32 %v2211, %v2212
    %v2214 = vrot.slane %v2213, 1
    %v2215 = vadd.f32 %v2213, %v2214
    %v2216 = vsel %vm784, %v2202, 0.0
    %v2217 = vsel %vm784, %v2204, 0.0
    %v2218 = vadd.f32 %v2216, %v2217
    %v2219 = vsel %vm809, %v2206, 0.0
    %v2220 = vadd.f32 %v2218, %v2219
    %v2221 = vrot.slane %v2220, 4
    %v2222 = vadd.f32 %v2220, %v2221
    %v2223 = vrot.slane %v2222, 2
    %v2224 = vadd.f32 %v2222, %v2223
    %v2225 = vrot.slane %v2224, 1
    %v2226 = vadd.f32 %v2224, %v2225
    %v2227 = vadd.f32 %v2193, %v2215
    %v2228 = vadd.f32 %v2194, %v2226
    %v2230 = vsel %vm784, %v2228, 0
    %2232 = vmatprep.subr.mxu0 %v64
    %2233 = vmatpush1.msra.mxu0 %v63
    %2234 = vmatprep.subr.mxu0 %v66
    %2235 = vmatpush1.msra.mxu0 %v65
    %2236 = vmatprep.subr.mxu0 %v68
    %2237 = vmatpush1.msra.mxu0 %v67
    %2238 = vmatprep.subr.mxu0 %v70
    %2239 = vmatpush1.msra.mxu0 %v69
    %2240 = vmatprep.subr.mxu0 %v72
    %2241 = vmatpush1.msra.mxu0 %v71
    %2242 = vmatprep.subr.mxu0 %v74
    %2243 = vmatpush1.msra.mxu0 %v73
    %2244 = vmatprep.subr.mxu0 %v76
    %2245 = vmatpush1.msra.mxu0 %v75
    %2246 = vmatprep.subr.mxu0 %v78
    %2247 = vmatpush1.msra.mxu0 %v77
    %2248 = vmatprep.subr.mxu0 %v80
    %2249 = vmatpush1.msra.mxu0 %v79
    %2250 = vmatprep.subr.mxu0 %v82
    %2251 = vmatpush1.msra.mxu0 %v81
    %2252 = vmatprep.subr.mxu0 %v84
    %2253 = vmatpush1.msra.mxu0 %v83
    %2254 = vmatprep.subr.mxu0 %v86
    %2255 = vmatpush1.msra.mxu0 %v85
    %2256 = vmatprep.subr.mxu0 %v88
    %2257 = vmatpush1.msra.mxu0 %v87
    %2258 = vmatprep.subr.mxu0 %v90
    %2259 = vmatpush1.msra.mxu0 %v89
    %2260 = vmatprep.subr.mxu0 %v92
    %2261 = vmatpush1.msra.mxu0 %v91
    %2262 = vmatprep.subr.mxu0 %v94
    %2263 = vmatpush1.msra.mxu0 %v93
    %2264 = vmatprep.subr.mxu0 %v96
    %2265 = vmatpush1.msra.mxu0 %v95
    %2266 = vmatprep.subr.mxu0 %v98
    %2267 = vmatpush1.msra.mxu0 %v97
    %2268 = vmatprep.subr.mxu0 0.0
    %2269 = vmatpush1.msra.mxu0 0.0
    %2270 = vmatprep.subr.mxu0 0.0
    %2271 = vmatpush1.msra.mxu0 0.0
    %2272 = vmatprep.subr.mxu0 0.0
    %2273 = vmatpush1.msra.mxu0 0.0
    %2274 = vmatprep.subr.mxu0 0.0
    %2275 = vmatpush1.msra.mxu0 0.0
    %2276 = vmatprep.subr.mxu0 0.0
    %2277 = vmatpush1.msra.mxu0 0.0
    %2278 = vmatprep.subr.mxu0 0.0
    %2279 = vmatpush1.msra.mxu0 0.0
    %2280 = vmatprep.subr.mxu0 0.0
    %2281 = vmatpush1.msra.mxu0 0.0
    %2282 = vmatprep.subr.mxu0 0.0
    %2283 = vmatpush1.msra.mxu0 0.0
    %2284 = vmatprep.subr.mxu0 0.0
    %2285 = vmatpush1.msra.mxu0 0.0
    %2286 = vmatprep.subr.mxu0 0.0
    %2287 = vmatpush1.msra.mxu0 0.0
    %2288 = vmatprep.subr.mxu0 0.0
    %2289 = vmatpush1.msra.mxu0 0.0
    %2290 = vmatprep.subr.mxu0 0.0
    %2291 = vmatpush1.msra.mxu0 0.0
    %2292 = vmatprep.subr.mxu0 0.0
    %2293 = vmatpush1.msra.mxu0 0.0
    %2294 = vmatprep.subr.mxu0 0.0
    %2295 = vmatpush1.msra.mxu0 0.0
    %2296 = vmatprep.mubr.f32.mxu0 %v2230
    %2297 = vmatmul.mubr.f32.gmra.mrb[0].mxu0 %v2227
    %v2298 = vpop.f32.mrb[0].mxu0
    %v2299 = vadd.f32 0.0, %v2298
    %v2300 = vpop.f32.mrb[0].mxu0
    %v2301 = vadd.f32 0.0, %v2300
    %2302 = vdwg.mxu0
    %v2303 = vmul.f32 %v2299, 0.0015432099
    %v2304 = vmul.f32 %v2301, 0.0015432099
    %v2305 = vadd.f32 %v2303, 1e-05
    %v2306 = vadd.f32 %v2304, 1e-05
    %v2307 = vrsqrt.pop %v2305
    %v2308 = vrsqrt.pop %v2306
    %v2309 = vlaneseq
    %v2310 = vshrl.u32 %v2309, 7
    %v2311 = vsub.s32 0, %v2310
    %v2312 = vrot.slane %v2307, %v2311
    %v2313 = vlaneseq
    %v2314 = vshrl.u32 %v2313, 7
    %v2315 = vsub.s32 0, %v2314
    %v2316 = vrot.slane %v2308, %v2315
    %v2317 = vmul.f32 %v2161, %v2312
    %v2318 = vmul.f32 %v2162, %v2316
    %v2319 = vmul.f32 %v2163, %v2312
    %v2320 = vmul.f32 %v2164, %v2316
    %v2321 = vmul.f32 %v2165, %v2312
    %v2322 = vmul.f32 %v2166, %v2316
    %v2324 = vlaneseq
    %v2325 = vshrl.u32 %v2324, 7
    %v2326 = vsub.s32 0, %v2325
    %v2327 = vrot.slane %v2031, %v2326
    %v2328 = vlaneseq
    %v2329 = vshrl.u32 %v2328, 7
    %v2330 = vsub.s32 1, %v2329
    %v2331 = vrot.slane %v2031, %v2330
    %v2334 = vmul.f32 %v2317, %v2327
    %v2335 = vmul.f32 %v2318, %v2331
    %v2336 = vmul.f32 %v2319, %v2327
    %v2337 = vmul.f32 %v2320, %v2331
    %v2338 = vmul.f32 %v2321, %v2327
    %v2339 = vmul.f32 %v2322, %v2331
    %v2341 = vlaneseq
    %v2342 = vshrl.u32 %v2341, 7
    %v2343 = vsub.s32 0, %v2342
    %v2344 = vrot.slane %v2032, %v2343
    %v2345 = vlaneseq
    %v2346 = vshrl.u32 %v2345, 7
    %v2347 = vsub.s32 1, %v2346
    %v2348 = vrot.slane %v2032, %v2347
    %v2351 = vadd.f32 %v2334, %v2344
    %v2352 = vadd.f32 %v2335, %v2348
    %v2353 = vadd.f32 %v2336, %v2344
    %v2354 = vadd.f32 %v2337, %v2348
    %v2355 = vadd.f32 %v2338, %v2344
    %v2356 = vadd.f32 %v2339, %v2348
    %v2357 = vmax.f32 %v2351, 0.0
    %v2358 = vmax.f32 %v2352, 0.0
    %v2359 = vmax.f32 %v2353, 0.0
    %v2360 = vmax.f32 %v2354, 0.0
    %v2361 = vmax.f32 %v2355, 0.0
    %v2362 = vmax.f32 %v2356, 0.0
    %v2363 = vmul.f32 %v2195, %v2312
    %v2364 = vmul.f32 %v2196, %v2316
    %v2365 = vmul.f32 %v2197, %v2312
    %v2366 = vmul.f32 %v2198, %v2316
    %v2367 = vmul.f32 %v2199, %v2312
    %v2368 = vmul.f32 %v2200, %v2316
    %v2369 = vmul.f32 %v2363, %v2327
    %v2370 = vmul.f32 %v2364, %v2331
    %v2371 = vmul.f32 %v2365, %v2327
    %v2372 = vmul.f32 %v2366, %v2331
    %v2373 = vmul.f32 %v2367, %v2327
    %v2374 = vmul.f32 %v2368, %v2331
    %v2375 = vadd.f32 %v2369, %v2344
    %v2376 = vadd.f32 %v2370, %v2348
    %v2377 = vadd.f32 %v2371, %v2344
    %v2378 = vadd.f32 %v2372, %v2348
    %v2379 = vadd.f32 %v2373, %v2344
    %v2380 = vadd.f32 %v2374, %v2348
    %v2381 = vmax.f32 %v2375, 0.0
    %v2382 = vmax.f32 %v2376, 0.0
    %v2383 = vmax.f32 %v2377, 0.0
    %v2384 = vmax.f32 %v2378, 0.0
    %v2385 = vmax.f32 %v2379, 0.0
    %v2386 = vmax.f32 %v2380, 0.0
    %2387 = vst [vmem:[%s10] sm:$0xff] %v2357
    %2388 = vst.msk [vmem:[%s10 + $0x8] sm:$0xff] %vm784, %v2358
    %2389 = vst [vmem:[%s10 + $0x10] sm:$0xff] %v2359
    %2390 = vst.msk [vmem:[%s10 + $0x18] sm:$0xff] %vm784, %v2360
    %2391 = vst [vmem:[%s10 + $0x20] sm:$0x3] %v2361
    %2392 = vst.msk [vmem:[%s10 + $0x28] sm:$0x3] %vm809, %v2362
    %v2399 = vrot.slane %v2381, 6
    %v2400 = vrot.slane %v2382, 6
    %v2401 = vrot.slane %v2383, 6
    %v2402 = vsel %vm797, %v2399, %v2401
    %v2403 = vrot.slane %v2384, 6
    %v2404 = vsel %vm797, %v2400, %v2403
    %v2405 = vrot.slane %v2385, 6
    %v2406 = vsel %vm797, %v2401, %v2405
    %v2407 = vrot.slane %v2386, 6
    %v2408 = vsel %vm797, %v2403, %v2407
    %2415 = vst [vmem:[%s10 + $0x20] sm:$0xfc] %v2399
    %vm2416 = vcmask 130050
    %2417 = vst.msk [vmem:[%s10 + $0x28] sm:$0xfc] %vm2416, %v2400
    %2418 = vst [vmem:[%s10 + $0x30] sm:$0xff] %v2402
    %2419 = vst.msk [vmem:[%s10 + $0x38] sm:$0xff] %vm784, %v2404
    %2420 = vst [vmem:[%s10 + $0x40] sm:$0xf] %v2406
    %vm2421 = vcmask 125952
    %2422 = vst.msk [vmem:[%s10 + $0x48] sm:$0xf] %vm2421, %v2408
    // Predicated region
    $region50: #{conv2d_transpose_block.1} parent=1 // pred_check
      _
    $region51: #{conv2d_transpose_block.1} parent=1 // pred_check_branch
      %2424 = sbr.rel (0) target = $region53
    $region52: #{conv2d_transpose_block.1} parent=1 // pred_region
      _
    $region53: #{conv2d_transpose_block.1} parent=1 // pred_fallthru
      _
    // Predicated region
    $region54: #{conv2d_transpose_block.1} parent=1 // pred_check
      _
    $region55: #{conv2d_transpose_block.1} parent=1 // pred_check_branch
      %2426 = sbr.rel (0) target = $region57
    $region56: #{conv2d_transpose_block.1} parent=1 // pred_region
      _
    $region57: #{conv2d_transpose_block.1} parent=1 // pred_fallthru
      _
    %2427 = vsyncpa [#allocation5], 1
    %2428 = vsyncpa [#allocation7], 1

</llo_original>
